<compile_context>
chip_gen: v6e
topology: v6e:2x2x1
jax: 0.10.0
libtpu: 0.0.40
codegen_flags: <defaults>
</compile_context>

<pallas_src>
import functools
import jax
import jax.numpy as jnp
from jax.experimental import pallas as pl
from jax.experimental.pallas import tpu as pltpu


def _round_up(x, m):
    return ((x + m - 1) // m) * m


def _device_vmem_budget():
    """~75% of this device's per-core VMEM (64 MiB on v7x, 128 MiB on v5e/v6e)."""
    try:
        cap = int(pltpu.get_tpu_info().vmem_capacity_bytes)
    except Exception:
        cap = 64 << 20  # conservative (v7x-sized) fallback
    return int(0.75 * cap)


def _head_kernel(x_ref, w1_ref, b1_ref, gamma_ref, beta_ref,
                 wdec_ref, bdec_ref, o_ref, h_ref, *, eps, mxu_dtype):
    # grid = (row_tiles, vocab_tiles); vocab axis is inner + "arbitrary" so the
    # dense+ReLU+LayerNorm hidden is computed once per row tile (j == 0) and
    # reused (already in MXU dtype) from VMEM scratch for every vocab tile.
    j = pl.program_id(1)

    @pl.when(j == 0)
    def _():
        # C.dense: Linear(H, H) + bias  (MXU, f32 accumulation)
        h = jnp.dot(x_ref[...], w1_ref[...], preferred_element_type=jnp.float32)
        h = h + b1_ref[...]
        # C.transform_act_fn: relu
        h = jnp.maximum(h, 0.0)
        # C.LayerNorm(H, eps): mean/var/rsqrt kept in f32
        mean = jnp.mean(h, axis=-1, keepdims=True)
        c = h - mean
        var = jnp.mean(c * c, axis=-1, keepdims=True)
        inv = jax.lax.rsqrt(var + eps)
        # downcast to MXU dtype once per row tile (not per vocab tile)
        h_ref[...] = (c * inv * gamma_ref[...] + beta_ref[...]).astype(mxu_dtype)

    # B.decoder: Linear(H, V) over the current vocab tile + shared bias
    out = jnp.dot(h_ref[...], wdec_ref[...], preferred_element_type=jnp.float32)
    o_ref[...] = (out + bdec_ref[...]).astype(o_ref.dtype)


def _head_kernel_small_m(x_ref, w1_ref, b1_ref, gamma_ref, beta_ref,
                         wdec_ref, bdec_ref, o_ref, *, eps, mxu_dtype):
    # Single row tile: vocab is the only grid axis and is marked "parallel"
    # (megacore split on v7x). The cheap dense+ReLU+LN is recomputed per vocab
    # tile -- negligible vs. the tm x H x V decoder matmul.
    h = jnp.dot(x_ref[...], w1_ref[...], preferred_element_type=jnp.float32)
    h = h + b1_ref[...]
    h = jnp.maximum(h, 0.0)
    mean = jnp.mean(h, axis=-1, keepdims=True)
    c = h - mean
    var = jnp.mean(c * c, axis=-1, keepdims=True)
    inv = jax.lax.rsqrt(var + eps)
    h = (c * inv * gamma_ref[...] + beta_ref[...]).astype(mxu_dtype)
    out = jnp.dot(h, wdec_ref[...], preferred_element_type=jnp.float32)
    o_ref[...] = (out + bdec_ref[...]).astype(o_ref.dtype)


def mlm_head_forward(x, w1, b1, gamma, beta, w_dec, b_dec, *,
                     eps=1e-12, tm=512, tn=1024, use_bf16=True,
                     out_dtype=jnp.float32, single_buffer_consts=True):
    """x: (B, S, H) float32 -> (B, S, V) logits (out_dtype)."""
    Bsz, S, H = x.shape
    V = w_dec.shape[1]
    M = Bsz * S

    mxu_dtype = jnp.bfloat16 if use_bf16 else jnp.float32
    xb = jnp.dtype(mxu_dtype).itemsize
    ob = jnp.dtype(out_dtype).itemsize
    budget = _device_vmem_budget()

    # --- tile sizing + padding (no divisibility asserts) ------------------
    tm = max(8, min(tm, _round_up(M, 8)))
    tn = min(tn, _round_up(V, 128))

    def est(tm_, tn_, single_buf):
        wf = 1 if single_buf else 2
        return (2 * tm_ * H * xb                 # x tile (double-buffered)
                + wf * (H * H * xb + 3 * H * 4)  # dense weight + b1/gamma/beta
                + 2 * (H * tn_ * xb + tn_ * 4)   # decoder weight/bias tiles
                + 2 * tm_ * tn_ * ob             # output tile
                + tm_ * H * xb                   # hidden scratch
                + (4 << 20))                     # headroom

    # shrink tiles if the estimate would blow this device's VMEM budget
    while est(tm, tn, single_buffer_consts) > budget and tn > 512:
        tn = max(512, tn // 2)
    while est(tm, tn, single_buffer_consts) > budget and tm > 256:
        tm = max(256, tm // 2)

    M_pad = _round_up(M, tm)
    V_pad = _round_up(V, tn)

    # x shipped in MXU dtype (halves DMA traffic + x double buffer vs f32)
    x2 = x.reshape(M, H).astype(mxu_dtype)
    if M_pad != M:
        x2 = jnp.pad(x2, ((0, M_pad - M), (0, 0)))
    w_dec_p, b_dec_p = w_dec, b_dec
    if V_pad != V:
        w_dec_p = jnp.pad(w_dec, ((0, 0), (0, V_pad - V)))
        b_dec_p = jnp.pad(b_dec, ((0, V_pad - V),))

    # matmul operands in MXU-native dtype; bias / LN params stay f32
    w1_m = w1.astype(mxu_dtype)
    wdec_m = w_dec_p.astype(mxu_dtype)
    b1_2 = b1.reshape(1, H).astype(jnp.float32)
    gamma2 = gamma.reshape(1, H).astype(jnp.float32)
    beta2 = beta.reshape(1, H).astype(jnp.float32)
    bdec2 = b_dec_p.reshape(1, V_pad).astype(jnp.float32)

    small_m = (M_pad // tm) == 1
    # conservative (double-buffered) estimate for the compiler limit, clamped
    # to the device budget
    vmem_bytes = int(min(max(est(tm, tn, False), 16 << 20), budget))

    def build_and_run(single_buf):
        if single_buf:
            def const_spec(shape, imap):
                return pl.BlockSpec(shape, imap, pipeline_mode=pl.Buffered(1))
        else:
            def const_spec(shape, imap):
                return pl.BlockSpec(shape, imap)

        if small_m:
            grid = (V_pad // tn,)
            kernel = functools.partial(_head_kernel_small_m, eps=eps,
                                       mxu_dtype=mxu_dtype)
            in_specs = [
                const_spec((tm, H), lambda j: (0, 0)),     # x (single row tile)
                const_spec((H, H), lambda j: (0, 0)),      # dense weight
                const_spec((1, H), lambda j: (0, 0)),      # dense bias
                const_spec((1, H), lambda j: (0, 0)),      # LN gamma
                const_spec((1, H), lambda j: (0, 0)),      # LN beta
                pl.BlockSpec((H, tn), lambda j: (0, j)),   # decoder weight tile
                pl.BlockSpec((1, tn), lambda j: (0, j)),   # decoder bias tile
            ]
            out_spec = pl.BlockSpec((tm, tn), lambda j: (0, j))
            scratch = []
            dims = ("parallel",)
        else:
            grid = (M_pad // tm, V_pad // tn)
            kernel = functools.partial(_head_kernel, eps=eps,
                                       mxu_dtype=mxu_dtype)
            in_specs = [
                pl.BlockSpec((tm, H), lambda i, j: (i, 0)),   # x row tile
                const_spec((H, H), lambda i, j: (0, 0)),      # dense weight
                const_spec((1, H), lambda i, j: (0, 0)),      # dense bias
                const_spec((1, H), lambda i, j: (0, 0)),      # LN gamma
                const_spec((1, H), lambda i, j: (0, 0)),      # LN beta
                pl.BlockSpec((H, tn), lambda i, j: (0, j)),   # decoder weight tile
                pl.BlockSpec((1, tn), lambda i, j: (0, j)),   # decoder bias tile
            ]
            out_spec = pl.BlockSpec((tm, tn), lambda i, j: (i, j))
            scratch = [pltpu.VMEM((tm, H), mxu_dtype)]
            dims = ("parallel", "arbitrary")

        out2 = pl.pallas_call(
            kernel,
            out_shape=jax.ShapeDtypeStruct((M_pad, V_pad), out_dtype),
            grid_spec=pltpu.PrefetchScalarGridSpec(
                num_scalar_prefetch=0,
                grid=grid,
                in_specs=in_specs,
                out_specs=out_spec,
                scratch_shapes=scratch),
            compiler_params=pltpu.CompilerParams(
                dimension_semantics=dims,
                vmem_limit_bytes=vmem_bytes),
        )(x2, w1_m, b1_2, gamma2, beta2, wdec_m, bdec2)
        return jax.block_until_ready(out2)

    if single_buffer_consts:
        try:
            out2 = build_and_run(True)
        except Exception:
            # fall back to default double-buffering if Buffered(1) is rejected
            out2 = build_and_run(False)
    else:
        out2 = build_and_run(False)

    return out2[:M, :V].reshape(Bsz, S, V)


def init_params(key, hidden_size, vocab_size):
    """Deterministic synthetic init matching the PyTorch module's shapes."""
    k1, k2, k3 = jax.random.split(key, 3)
    bound1 = 1.0 / jnp.sqrt(hidden_size)
    # C.dense: nn.Linear(H, H)  (weight stored transposed -> (in, out))
    w1 = jax.random.uniform(k1, (hidden_size, hidden_size),
                            minval=-bound1, maxval=bound1, dtype=jnp.float32)
    b1 = jax.random.uniform(k2, (hidden_size,),
                            minval=-bound1, maxval=bound1, dtype=jnp.float32)
    # C.LayerNorm
    gamma = jnp.ones((hidden_size,), jnp.float32)
    beta = jnp.zeros((hidden_size,), jnp.float32)
    # B.decoder: nn.Linear(H, V, bias=False) -> (in, out); shared bias = zeros(V)
    w_dec = jax.random.uniform(k3, (hidden_size, vocab_size),
                               minval=-bound1, maxval=bound1, dtype=jnp.float32)
    b_dec = jnp.zeros((vocab_size,), jnp.float32)
    return w1, b1, gamma, beta, w_dec, b_dec


def _reference(x, w1, b1, gamma, beta, w_dec, b_dec, *, eps, mxu_dtype):
    """Pure-JAX reference with the same MXU-dtype matmul-operand casting."""
    h = jnp.dot(x.astype(mxu_dtype), w1.astype(mxu_dtype),
                preferred_element_type=jnp.float32) + b1
    h = jnp.maximum(h, 0.0)
    mu = h.mean(-1, keepdims=True)
    var = ((h - mu) ** 2).mean(-1, keepdims=True)
    h = (h - mu) * jax.lax.rsqrt(var + eps) * gamma + beta
    return jnp.dot(h.astype(mxu_dtype), w_dec.astype(mxu_dtype),
                   preferred_element_type=jnp.float32) + b_dec


if __name__ == "__main__":
    # small shapes; vocab tiled so both kernel paths / grid axes are exercised
    batch, seq, hidden, vocab = 2, 8, 128, 512
    key = jax.random.PRNGKey(0)
    kx, kp = jax.random.split(key)

    x = jax.random.normal(kx, (batch, seq, hidden), dtype=jnp.float32)
    params = init_params(kp, hidden, vocab)
    ref = _reference(x, *params, eps=1e-12, mxu_dtype=jnp.bfloat16)

    # default tm -> single row tile -> small-M (vocab-parallel) path
    out = mlm_head_forward(x, *params, eps=1e-12, tn=256, use_bf16=True)
    out = jax.block_until_ready(out)
    assert out.shape == (batch, seq, vocab)
    assert jnp.max(jnp.abs(out - ref)) < 2e-2, float(jnp.max(jnp.abs(out - ref)))

    # force multiple row tiles to exercise the scratch-reuse (2-D grid) path
    out2 = jax.block_until_ready(
        mlm_head_forward(x, *params, eps=1e-12, tm=8, tn=256, use_bf16=True))
    assert jnp.max(jnp.abs(out2 - ref)) < 2e-2, float(jnp.max(jnp.abs(out2 - ref)))

    # full-precision path against an f32 reference (both grid layouts)
    ref_f32 = _reference(x, *params, eps=1e-12, mxu_dtype=jnp.float32)
    out_f32 = jax.block_until_ready(
        mlm_head_forward(x, *params, eps=1e-12, tm=8, tn=256, use_bf16=False))
    assert jnp.max(jnp.abs(out_f32 - ref_f32)) < 1e-4
    out_f32b = jax.block_until_ready(
        mlm_head_forward(x, *params, eps=1e-12, tn=256, use_bf16=False))
    assert jnp.max(jnp.abs(out_f32b - ref_f32)) < 1e-4

    print("KERNEL_OK")
</pallas_src>

<mosaic_0001>
module attributes {stable_mosaic.version = 11 : i64} {
  func.func @_head_kernel_small_m(%arg0: i32, %arg1: memref<16x128xbf16, #tpu.memory_space<vmem>>, %arg2: memref<128x128xbf16, #tpu.memory_space<vmem>>, %arg3: memref<1x128xf32, #tpu.memory_space<vmem>>, %arg4: memref<1x128xf32, #tpu.memory_space<vmem>>, %arg5: memref<1x128xf32, #tpu.memory_space<vmem>>, %arg6: memref<128x256xbf16, #tpu.memory_space<vmem>>, %arg7: memref<1x256xf32, #tpu.memory_space<vmem>>, %arg8: memref<16x256xf32, #tpu.memory_space<vmem>>) attributes {dimension_semantics = [#tpu.dimension_semantics<parallel>], iteration_bounds = array<i64: 2>, scalar_prefetch = 0 : i64, scratch_operands = 0 : i64, tpu.core_type = #tpu.core_type<tc>, window_params = [{pipeline_mode = #tpu.pipeline_mode<synchronous>, transform_indices = @transform_0, window_bounds = array<i64: 16, 128>}, {pipeline_mode = #tpu.pipeline_mode<synchronous>, transform_indices = @transform_1, window_bounds = array<i64: 128, 128>}, {pipeline_mode = #tpu.pipeline_mode<synchronous>, transform_indices = @transform_2, window_bounds = array<i64: 1, 128>}, {pipeline_mode = #tpu.pipeline_mode<synchronous>, transform_indices = @transform_3, window_bounds = array<i64: 1, 128>}, {pipeline_mode = #tpu.pipeline_mode<synchronous>, transform_indices = @transform_4, window_bounds = array<i64: 1, 128>}, {transform_indices = @transform_5, window_bounds = array<i64: 128, 256>}, {transform_indices = @transform_6, window_bounds = array<i64: 1, 256>}, {transform_indices = @transform_7, window_bounds = array<i64: 16, 256>}]} {
    %c0 = arith.constant 0 : index
    %c0_0 = arith.constant 0 : index
    %0 = vector.load %arg1[%c0, %c0_0] : memref<16x128xbf16, #tpu.memory_space<vmem>>, vector<16x128xbf16>
    %c0_1 = arith.constant 0 : index
    %c0_2 = arith.constant 0 : index
    %1 = vector.load %arg2[%c0_1, %c0_2] : memref<128x128xbf16, #tpu.memory_space<vmem>>, vector<128x128xbf16>
    %cst = arith.constant dense<0.000000e+00> : vector<16x128xf32>
    %2 = tpu.matmul %0, %1, %cst {dimension_numbers = #tpu.dot_dimension_numbers<[1], [0], [0], [1], [0, 0, 1, 1], [], []>} : vector<16x128xbf16>, vector<128x128xbf16>, vector<16x128xf32> -> vector<16x128xf32>
    %c0_3 = arith.constant 0 : index
    %c0_4 = arith.constant 0 : index
    %3 = vector.load %arg3[%c0_3, %c0_4] : memref<1x128xf32, #tpu.memory_space<vmem>>, vector<1x128xf32>
    %4 = vector.broadcast %3 : vector<1x128xf32> to vector<16x128xf32>
    %5 = arith.addf %2, %4 : vector<16x128xf32>
    %cst_5 = arith.constant 0.000000e+00 : f32
    %6 = vector.broadcast %cst_5 : f32 to vector<16x128xf32>
    %7 = arith.maximumf %5, %6 : vector<16x128xf32>
    %cst_6 = arith.constant dense<0.000000e+00> : vector<16xf32>
    %8 = vector.multi_reduction <add>, %7, %cst_6 [1] : vector<16x128xf32> to vector<16xf32>
    %9 = vector.shape_cast %8 : vector<16xf32> to vector<16x1xf32>
    %cst_7 = arith.constant 1.280000e+02 : f32
    %10 = vector.broadcast %cst_7 : f32 to vector<16x1xf32>
    %11 = arith.divf %9, %10 : vector<16x1xf32>
    %12 = vector.broadcast %11 : vector<16x1xf32> to vector<16x128xf32>
    %13 = arith.subf %7, %12 : vector<16x128xf32>
    %14 = arith.mulf %13, %13 : vector<16x128xf32>
    %cst_8 = arith.constant dense<0.000000e+00> : vector<16xf32>
    %15 = vector.multi_reduction <add>, %14, %cst_8 [1] : vector<16x128xf32> to vector<16xf32>
    %16 = vector.shape_cast %15 : vector<16xf32> to vector<16x1xf32>
    %cst_9 = arith.constant 1.280000e+02 : f32
    %17 = vector.broadcast %cst_9 : f32 to vector<16x1xf32>
    %18 = arith.divf %16, %17 : vector<16x1xf32>
    %cst_10 = arith.constant 9.99999996E-13 : f32
    %19 = vector.broadcast %cst_10 : f32 to vector<16x1xf32>
    %20 = arith.addf %18, %19 : vector<16x1xf32>
    %21 = math.rsqrt %20 : vector<16x1xf32>
    %22 = vector.broadcast %21 : vector<16x1xf32> to vector<16x128xf32>
    %23 = arith.mulf %13, %22 : vector<16x128xf32>
    %c0_11 = arith.constant 0 : index
    %c0_12 = arith.constant 0 : index
    %24 = vector.load %arg4[%c0_11, %c0_12] : memref<1x128xf32, #tpu.memory_space<vmem>>, vector<1x128xf32>
    %25 = vector.broadcast %24 : vector<1x128xf32> to vector<16x128xf32>
    %26 = arith.mulf %23, %25 : vector<16x128xf32>
    %c0_13 = arith.constant 0 : index
    %c0_14 = arith.constant 0 : index
    %27 = vector.load %arg5[%c0_13, %c0_14] : memref<1x128xf32, #tpu.memory_space<vmem>>, vector<1x128xf32>
    %28 = vector.broadcast %27 : vector<1x128xf32> to vector<16x128xf32>
    %29 = arith.addf %26, %28 : vector<16x128xf32>
    %30 = arith.truncf %29 : vector<16x128xf32> to vector<16x128xbf16>
    %c0_15 = arith.constant 0 : index
    %c0_16 = arith.constant 0 : index
    %31 = vector.load %arg6[%c0_15, %c0_16] : memref<128x256xbf16, #tpu.memory_space<vmem>>, vector<128x256xbf16>
    %cst_17 = arith.constant dense<0.000000e+00> : vector<16x256xf32>
    %32 = tpu.matmul %30, %31, %cst_17 {dimension_numbers = #tpu.dot_dimension_numbers<[1], [0], [0], [1], [0, 0, 1, 1], [], []>} : vector<16x128xbf16>, vector<128x256xbf16>, vector<16x256xf32> -> vector<16x256xf32>
    %c0_18 = arith.constant 0 : index
    %c0_19 = arith.constant 0 : index
    %33 = vector.load %arg7[%c0_18, %c0_19] : memref<1x256xf32, #tpu.memory_space<vmem>>, vector<1x256xf32>
    %34 = vector.broadcast %33 : vector<1x256xf32> to vector<16x256xf32>
    %35 = arith.addf %32, %34 : vector<16x256xf32>
    %c0_20 = arith.constant 0 : index
    %c0_21 = arith.constant 0 : index
    %36 = vector.load %arg8[%c0_20, %c0_21] : memref<16x256xf32, #tpu.memory_space<vmem>>, vector<16x256xf32>
    tpu.vector_store %arg8[%c0_20, %c0_21], %35 {strides = array<i32>} : memref<16x256xf32, #tpu.memory_space<vmem>>, vector<16x256xf32>,
    return
  }
  func.func @transform_0(%arg0: i32) -> (i32, i32) {
    %c0_i32 = arith.constant 0 : i32
    %c0_i32_0 = arith.constant 0 : i32
    %c0_i32_1 = arith.constant 0 : i32
    return %c0_i32, %c0_i32_0 : i32, i32
  }
  func.func @transform_1(%arg0: i32) -> (i32, i32) {
    %c0_i32 = arith.constant 0 : i32
    %c0_i32_0 = arith.constant 0 : i32
    %c0_i32_1 = arith.constant 0 : i32
    return %c0_i32, %c0_i32_0 : i32, i32
  }
  func.func @transform_2(%arg0: i32) -> (i32, i32) {
    %c0_i32 = arith.constant 0 : i32
    %c0_i32_0 = arith.constant 0 : i32
    %c0_i32_1 = arith.constant 0 : i32
    return %c0_i32, %c0_i32_0 : i32, i32
  }
  func.func @transform_3(%arg0: i32) -> (i32, i32) {
    %c0_i32 = arith.constant 0 : i32
    %c0_i32_0 = arith.constant 0 : i32
    %c0_i32_1 = arith.constant 0 : i32
    return %c0_i32, %c0_i32_0 : i32, i32
  }
  func.func @transform_4(%arg0: i32) -> (i32, i32) {
    %c0_i32 = arith.constant 0 : i32
    %c0_i32_0 = arith.constant 0 : i32
    %c0_i32_1 = arith.constant 0 : i32
    return %c0_i32, %c0_i32_0 : i32, i32
  }
  func.func @transform_5(%arg0: i32) -> (i32, i32) {
    %c0_i32 = arith.constant 0 : i32
    %c0_i32_0 = arith.constant 0 : i32
    return %c0_i32, %arg0 : i32, i32
  }
  func.func @transform_6(%arg0: i32) -> (i32, i32) {
    %c0_i32 = arith.constant 0 : i32
    %c0_i32_0 = arith.constant 0 : i32
    return %c0_i32, %arg0 : i32, i32
  }
  func.func @transform_7(%arg0: i32) -> (i32, i32) {
    %c0_i32 = arith.constant 0 : i32
    %c0_i32_0 = arith.constant 0 : i32
    return %c0_i32, %arg0 : i32, i32
  }
}

module attributes {stable_mosaic.version = 11 : i64} {
  func.func @_head_kernel_small_m(%arg0: i32, %arg1: memref<16x128xbf16, #tpu.memory_space<vmem>>, %arg2: memref<128x128xbf16, #tpu.memory_space<vmem>>, %arg3: memref<1x128xf32, #tpu.memory_space<vmem>>, %arg4: memref<1x128xf32, #tpu.memory_space<vmem>>, %arg5: memref<1x128xf32, #tpu.memory_space<vmem>>, %arg6: memref<128x256xbf16, #tpu.memory_space<vmem>>, %arg7: memref<1x256xf32, #tpu.memory_space<vmem>>, %arg8: memref<16x256xf32, #tpu.memory_space<vmem>>) attributes {dimension_semantics = [#tpu.dimension_semantics<parallel>], iteration_bounds = array<i64: 2>, scalar_prefetch = 0 : i64, scratch_operands = 0 : i64, tpu.core_type = #tpu.core_type<tc>, window_params = [{pipeline_mode = #tpu.pipeline_mode<synchronous>, transform_indices = @transform_0, window_bounds = array<i64: 16, 128>}, {pipeline_mode = #tpu.pipeline_mode<synchronous>, transform_indices = @transform_1, window_bounds = array<i64: 128, 128>}, {pipeline_mode = #tpu.pipeline_mode<synchronous>, transform_indices = @transform_2, window_bounds = array<i64: 1, 128>}, {pipeline_mode = #tpu.pipeline_mode<synchronous>, transform_indices = @transform_3, window_bounds = array<i64: 1, 128>}, {pipeline_mode = #tpu.pipeline_mode<synchronous>, transform_indices = @transform_4, window_bounds = array<i64: 1, 128>}, {transform_indices = @transform_5, window_bounds = array<i64: 128, 256>}, {transform_indices = @transform_6, window_bounds = array<i64: 1, 256>}, {transform_indices = @transform_7, window_bounds = array<i64: 16, 256>}]} {
    %c0 = arith.constant 0 : index
    %c0_0 = arith.constant 0 : index
    %0 = vector.load %arg1[%c0, %c0_0] : memref<16x128xbf16, #tpu.memory_space<vmem>>, vector<16x128xbf16>
    %c0_1 = arith.constant 0 : index
    %c0_2 = arith.constant 0 : index
    %1 = vector.load %arg2[%c0_1, %c0_2] : memref<128x128xbf16, #tpu.memory_space<vmem>>, vector<128x128xbf16>
    %cst = arith.constant dense<0.000000e+00> : vector<16x128xf32>
    %2 = tpu.matmul %0, %1, %cst {dimension_numbers = #tpu.dot_dimension_numbers<[1], [0], [0], [1], [0, 0, 1, 1], [], []>} : vector<16x128xbf16>, vector<128x128xbf16>, vector<16x128xf32> -> vector<16x128xf32>
    %c0_3 = arith.constant 0 : index
    %c0_4 = arith.constant 0 : index
    %3 = vector.load %arg3[%c0_3, %c0_4] : memref<1x128xf32, #tpu.memory_space<vmem>>, vector<1x128xf32>
    %4 = vector.broadcast %3 : vector<1x128xf32> to vector<16x128xf32>
    %5 = arith.addf %2, %4 : vector<16x128xf32>
    %cst_5 = arith.constant 0.000000e+00 : f32
    %6 = vector.broadcast %cst_5 : f32 to vector<16x128xf32>
    %7 = arith.maximumf %5, %6 : vector<16x128xf32>
    %cst_6 = arith.constant dense<0.000000e+00> : vector<16xf32>
    %8 = vector.multi_reduction <add>, %7, %cst_6 [1] : vector<16x128xf32> to vector<16xf32>
    %9 = vector.shape_cast %8 : vector<16xf32> to vector<16x1xf32>
    %cst_7 = arith.constant 1.280000e+02 : f32
    %10 = vector.broadcast %cst_7 : f32 to vector<16x1xf32>
    %11 = arith.divf %9, %10 : vector<16x1xf32>
    %12 = vector.broadcast %11 : vector<16x1xf32> to vector<16x128xf32>
    %13 = arith.subf %7, %12 : vector<16x128xf32>
    %14 = arith.mulf %13, %13 : vector<16x128xf32>
    %cst_8 = arith.constant dense<0.000000e+00> : vector<16xf32>
    %15 = vector.multi_reduction <add>, %14, %cst_8 [1] : vector<16x128xf32> to vector<16xf32>
    %16 = vector.shape_cast %15 : vector<16xf32> to vector<16x1xf32>
    %cst_9 = arith.constant 1.280000e+02 : f32
    %17 = vector.broadcast %cst_9 : f32 to vector<16x1xf32>
    %18 = arith.divf %16, %17 : vector<16x1xf32>
    %cst_10 = arith.constant 9.99999996E-13 : f32
    %19 = vector.broadcast %cst_10 : f32 to vector<16x1xf32>
    %20 = arith.addf %18, %19 : vector<16x1xf32>
    %21 = math.rsqrt %20 : vector<16x1xf32>
    %22 = vector.broadcast %21 : vector<16x1xf32> to vector<16x128xf32>
    %23 = arith.mulf %13, %22 : vector<16x128xf32>
    %c0_11 = arith.constant 0 : index
    %c0_12 = arith.constant 0 : index
    %24 = vector.load %arg4[%c0_11, %c0_12] : memref<1x128xf32, #tpu.memory_space<vmem>>, vector<1x128xf32>
    %25 = vector.broadcast %24 : vector<1x128xf32> to vector<16x128xf32>
    %26 = arith.mulf %23, %25 : vector<16x128xf32>
    %c0_13 = arith.constant 0 : index
    %c0_14 = arith.constant 0 : index
    %27 = vector.load %arg5[%c0_13, %c0_14] : memref<1x128xf32, #tpu.memory_space<vmem>>, vector<1x128xf32>
    %28 = vector.broadcast %27 : vector<1x128xf32> to vector<16x128xf32>
    %29 = arith.addf %26, %28 : vector<16x128xf32>
    %30 = arith.truncf %29 : vector<16x128xf32> to vector<16x128xbf16>
    %c0_15 = arith.constant 0 : index
    %c0_16 = arith.constant 0 : index
    %31 = vector.load %arg6[%c0_15, %c0_16] : memref<128x256xbf16, #tpu.memory_space<vmem>>, vector<128x256xbf16>
    %cst_17 = arith.constant dense<0.000000e+00> : vector<16x256xf32>
    %32 = tpu.matmul %30, %31, %cst_17 {dimension_numbers = #tpu.dot_dimension_numbers<[1], [0], [0], [1], [0, 0, 1, 1], [], []>} : vector<16x128xbf16>, vector<128x256xbf16>, vector<16x256xf32> -> vector<16x256xf32>
    %c0_18 = arith.constant 0 : index
    %c0_19 = arith.constant 0 : index
    %33 = vector.load %arg7[%c0_18, %c0_19] : memref<1x256xf32, #tpu.memory_space<vmem>>, vector<1x256xf32>
    %34 = vector.broadcast %33 : vector<1x256xf32> to vector<16x256xf32>
    %35 = arith.addf %32, %34 : vector<16x256xf32>
    %c0_20 = arith.constant 0 : index
    %c0_21 = arith.constant 0 : index
    %36 = vector.load %arg8[%c0_20, %c0_21] : memref<16x256xf32, #tpu.memory_space<vmem>>, vector<16x256xf32>
    tpu.vector_store %arg8[%c0_20, %c0_21], %35 {strides = array<i32>} : memref<16x256xf32, #tpu.memory_space<vmem>>, vector<16x256xf32>,
    return
  }
  func.func @transform_0(%arg0: i32) -> (i32, i32) {
    %c0_i32 = arith.constant 0 : i32
    %c0_i32_0 = arith.constant 0 : i32
    %c0_i32_1 = arith.constant 0 : i32
    return %c0_i32, %c0_i32_0 : i32, i32
  }
  func.func @transform_1(%arg0: i32) -> (i32, i32) {
    %c0_i32 = arith.constant 0 : i32
    %c0_i32_0 = arith.constant 0 : i32
    %c0_i32_1 = arith.constant 0 : i32
    return %c0_i32, %c0_i32_0 : i32, i32
  }
  func.func @transform_2(%arg0: i32) -> (i32, i32) {
    %c0_i32 = arith.constant 0 : i32
    %c0_i32_0 = arith.constant 0 : i32
    %c0_i32_1 = arith.constant 0 : i32
    return %c0_i32, %c0_i32_0 : i32, i32
  }
  func.func @transform_3(%arg0: i32) -> (i32, i32) {
    %c0_i32 = arith.constant 0 : i32
    %c0_i32_0 = arith.constant 0 : i32
    %c0_i32_1 = arith.constant 0 : i32
    return %c0_i32, %c0_i32_0 : i32, i32
  }
  func.func @transform_4(%arg0: i32) -> (i32, i32) {
    %c0_i32 = arith.constant 0 : i32
    %c0_i32_0 = arith.constant 0 : i32
    %c0_i32_1 = arith.constant 0 : i32
    return %c0_i32, %c0_i32_0 : i32, i32
  }
  func.func @transform_5(%arg0: i32) -> (i32, i32) {
    %c0_i32 = arith.constant 0 : i32
    %c0_i32_0 = arith.constant 0 : i32
    return %c0_i32, %arg0 : i32, i32
  }
  func.func @transform_6(%arg0: i32) -> (i32, i32) {
    %c0_i32 = arith.constant 0 : i32
    %c0_i32_0 = arith.constant 0 : i32
    return %c0_i32, %arg0 : i32, i32
  }
  func.func @transform_7(%arg0: i32) -> (i32, i32) {
    %c0_i32 = arith.constant 0 : i32
    %c0_i32_0 = arith.constant 0 : i32
    return %c0_i32, %arg0 : i32, i32
  }
}

</mosaic_0001>

<llo_original>
// kernel: tpu_custom_call.1
$region0: #{tpu_custom_call.1}
  #allocation0 [shape = 'u32[]', space=smem, size = 0x4, offset = 0x4, fixed_abs, tag = 'smem constant byte address 0x4 - core index']
  #allocation1 [shape = 'u32[144,128]{1,0:T(1,128)}', space=vmem, size = 0x12000, scoped, tag = 'internal scratch']
  %s0 = inlined_call_operand.hbm [shape: bf16[16,128], index: 0, kind: input, shape index: {}]
  %s1 = inlined_call_operand.hbm [shape: bf16[128,128], index: 1, kind: input, shape index: {}]
  %s2 = inlined_call_operand.vmem [shape: f32[1,128], index: 2, kind: input, shape index: {}]
  %s3 = inlined_call_operand.vmem [shape: f32[1,128], index: 3, kind: input, shape index: {}]
  %s4 = inlined_call_operand.vmem [shape: f32[1,128], index: 4, kind: input, shape index: {}]
  %s5 = inlined_call_operand.hbm [shape: bf16[128,512], index: 5, kind: input, shape index: {}]
  %s6 = inlined_call_operand.vmem [shape: f32[1,512], index: 6, kind: input, shape index: {}]
  %s7 = inlined_call_operand.hbm [shape: f32[16,512], index: 7, kind: output, shape index: {}]
  %s8 = sld [smem:[#allocation0]]
  $region73: #{tpu_custom_call.1} parent=0
    _
  %s10 = ssub.s32 1, %s8
  %s11 = scalar_select 0, %s10, %s8
  $region1: #{tpu_custom_call.1} parent=0
    #allocation2 [shape = 'u8[4096]{0}', space=vmem, size = 0x1000, scoped, tag = 'input window, operand 0, single buffered']
    #allocation3 [shape = 's32[2]{0}', space=sflag, size = 0x8, scoped, tag = 'scoped memory for tpu_custom_call.1']
    #allocation4 [shape = 's32[2]{0}', space=sflag, size = 0x8, scoped, tag = 'scoped memory for tpu_custom_call.1']
    #allocation5 [shape = 'u8[32768]{0}', space=vmem, size = 0x8000, scoped, tag = 'input window, operand 1, single buffered']
    #allocation6 [shape = 's32[1]{0}', space=sflag, size = 0x4, scoped, tag = 'scoped memory for tpu_custom_call.1']
    #allocation7 [shape = 'u8[131072]{0}', space=vmem, size = 0x20000, scoped, tag = 'input window, operand 5']
    #allocation8 [shape = 'u8[32768]{0}', space=vmem, size = 0x8000, scoped, tag = 'output window, operand 0']
    %12 = vsyncpa [#allocation3], 0
    %13 = vsyncpa [#allocation6], 0
    %14 = vsyncpa [#allocation4], 0
    %s15 = scalar_lea.sflag [#allocation4], 1
    %16 = vsyncpa %s15, 0
    loop: start=0, step=1, limit=4
    $region2: #{tpu_custom_call.1} parent=1 // loop_pre_header
      _
    $region3: #{tpu_custom_call.1} parent=1 // loop_header
      %s18 = sphi 0, %s22
      %p19 = scmp.ge.s32.totalorder %s18, 4
      %s26 = sphi 0, %s26
      %s28 = sphi 0, %s26
      %s29 = sphi 0, %s28
      %s43 = sphi 0, %s29
      %s47 = sphi 0, %s47
      %s49 = sphi 0, %s47
      %s50 = sphi 0, %s49
      %s64 = sphi 0, %s50
      %s68 = sphi 0, %s68
      %s70 = sphi 0, %s68
      %s71 = sphi 0, %s70
      %s85 = sphi 0, %s71
      %s89 = sphi 0, %s89
      %s91 = sphi 0, %s89
      %s92 = sphi 0, %s91
      %s106 = sphi 0, %s92
      %s110 = sphi 0, %s110
      %s112 = sphi 0, %s110
      %s113 = sphi 0, %s112
      %s127 = sphi 0, %s113
      %s133 = sphi 0, %s135
      %s136 = sphi 0, %s133
      %s137 = sphi 0, %s136
      %s153 = sphi 0, %s137
      %s159 = sphi 0, %s161
      %s162 = sphi 0, %s159
      %s163 = sphi 0, %s162
      %s179 = sphi 0, %s163
      %s185 = sphi 0, %s187
      %s188 = sphi 0, %s185
      %s189 = sphi 0, %s188
      %s205 = sphi 0, %s189
    $region4: #{tpu_custom_call.1} parent=1 // loop_header_branch
      %21 = sbr.rel (%p19) target = $region8
    $region5: #{tpu_custom_call.1} parent=1 // loop_body
      %s23 = ssub.s32 %s18, 1
      %s24 = ssub.s32 %s18, 2
      %s25 = sadd.s32 %s18, 1
      %s27 = sadd.s32 %s26, 1
      %p30 = scmp.eq.s32.totalorder %s18, 1
      %p31 = scmp.ne.s32.totalorder %s26, %s28
      %p32 = scmp.eq.s32.totalorder %s18, 0
      %p33 = por %p31, %p32
      %p34 = scmp.ne.s32.totalorder %s26, %s28
      %p35 = scmp.eq.s32.totalorder %s23, 1
      %p36 = por %p34, %p35
      %p37 = scmp.ne.s32.totalorder %s28, %s29
      %p38 = scmp.eq.s32.totalorder %s23, 0
      %p39 = por %p37, %p38
      %p40 = scmp.ne.s32.totalorder %s28, %s29
      %p41 = scmp.eq.s32.totalorder %s24, 1
      %p42 = por %p40, %p41
      %p44 = scmp.ne.s32.totalorder %s29, %s43
      %p45 = scmp.eq.s32.totalorder %s24, 0
      %p46 = por %p44, %p45
      %s48 = sadd.s32 %s47, 1
      %p51 = scmp.eq.s32.totalorder %s18, 1
      %p52 = scmp.ne.s32.totalorder %s47, %s49
      %p53 = scmp.eq.s32.totalorder %s18, 0
      %p54 = por %p52, %p53
      %p55 = scmp.ne.s32.totalorder %s47, %s49
      %p56 = scmp.eq.s32.totalorder %s23, 1
      %p57 = por %p55, %p56
      %p58 = scmp.ne.s32.totalorder %s49, %s50
      %p59 = scmp.eq.s32.totalorder %s23, 0
      %p60 = por %p58, %p59
      %p61 = scmp.ne.s32.totalorder %s49, %s50
      %p62 = scmp.eq.s32.totalorder %s24, 1
      %p63 = por %p61, %p62
      %p65 = scmp.ne.s32.totalorder %s50, %s64
      %p66 = scmp.eq.s32.totalorder %s24, 0
      %p67 = por %p65, %p66
      %s69 = sadd.s32 %s68, 1
      %p72 = scmp.eq.s32.totalorder %s18, 1
      %p73 = scmp.ne.s32.totalorder %s68, %s70
      %p74 = scmp.eq.s32.totalorder %s18, 0
      %p75 = por %p73, %p74
      %p76 = scmp.ne.s32.totalorder %s68, %s70
      %p77 = scmp.eq.s32.totalorder %s23, 1
      %p78 = por %p76, %p77
      %p79 = scmp.ne.s32.totalorder %s70, %s71
      %p80 = scmp.eq.s32.totalorder %s23, 0
      %p81 = por %p79, %p80
      %p82 = scmp.ne.s32.totalorder %s70, %s71
      %p83 = scmp.eq.s32.totalorder %s24, 1
      %p84 = por %p82, %p83
      %p86 = scmp.ne.s32.totalorder %s71, %s85
      %p87 = scmp.eq.s32.totalorder %s24, 0
      %p88 = por %p86, %p87
      %s90 = sadd.s32 %s89, 1
      %p93 = scmp.eq.s32.totalorder %s18, 1
      %p94 = scmp.ne.s32.totalorder %s89, %s91
      %p95 = scmp.eq.s32.totalorder %s18, 0
      %p96 = por %p94, %p95
      %p97 = scmp.ne.s32.totalorder %s89, %s91
      %p98 = scmp.eq.s32.totalorder %s23, 1
      %p99 = por %p97, %p98
      %p100 = scmp.ne.s32.totalorder %s91, %s92
      %p101 = scmp.eq.s32.totalorder %s23, 0
      %p102 = por %p100, %p101
      %p103 = scmp.ne.s32.totalorder %s91, %s92
      %p104 = scmp.eq.s32.totalorder %s24, 1
      %p105 = por %p103, %p104
      %p107 = scmp.ne.s32.totalorder %s92, %s106
      %p108 = scmp.eq.s32.totalorder %s24, 0
      %p109 = por %p107, %p108
      %s111 = sadd.s32 %s110, 1
      %p114 = scmp.eq.s32.totalorder %s18, 1
      %p115 = scmp.ne.s32.totalorder %s110, %s112
      %p116 = scmp.eq.s32.totalorder %s18, 0
      %p117 = por %p115, %p116
      %p118 = scmp.ne.s32.totalorder %s110, %s112
      %p119 = scmp.eq.s32.totalorder %s23, 1
      %p120 = por %p118, %p119
      %p121 = scmp.ne.s32.totalorder %s112, %s113
      %p122 = scmp.eq.s32.totalorder %s23, 0
      %p123 = por %p121, %p122
      %p124 = scmp.ne.s32.totalorder %s112, %s113
      %p125 = scmp.eq.s32.totalorder %s24, 1
      %p126 = por %p124, %p125
      %p128 = scmp.ne.s32.totalorder %s113, %s127
      %p129 = scmp.eq.s32.totalorder %s24, 0
      %p130 = por %p128, %p129
      %s131 = ssub.s32 %s18, %s25
      %p132 = scmp.eq.s32.totalorder %s131, 0
      %s134 = sadd.s32 %s133, 1
      %s135 = scalar_select %p132, %s133, %s134
      %p138 = pneg %p132
      %p139 = scmp.eq.s32.totalorder %s18, 1
      %p140 = por %p138, %p139
      %p141 = scmp.ne.s32.totalorder %s133, %s136
      %p142 = scmp.eq.s32.totalorder %s18, 0
      %p143 = por %p141, %p142
      %p144 = scmp.ne.s32.totalorder %s133, %s136
      %p145 = scmp.eq.s32.totalorder %s23, 1
      %p146 = por %p144, %p145
      %p147 = scmp.ne.s32.totalorder %s136, %s137
      %p148 = scmp.eq.s32.totalorder %s23, 0
      %p149 = por %p147, %p148
      %p150 = scmp.ne.s32.totalorder %s136, %s137
      %p151 = scmp.eq.s32.totalorder %s24, 1
      %p152 = por %p150, %p151
      %p154 = scmp.ne.s32.totalorder %s137, %s153
      %p155 = scmp.eq.s32.totalorder %s24, 0
      %p156 = por %p154, %p155
      %s157 = ssub.s32 %s18, %s25
      %p158 = scmp.eq.s32.totalorder %s157, 0
      %s160 = sadd.s32 %s159, 1
      %s161 = scalar_select %p158, %s159, %s160
      %p164 = pneg %p158
      %p165 = scmp.eq.s32.totalorder %s18, 1
      %p166 = por %p164, %p165
      %p167 = scmp.ne.s32.totalorder %s159, %s162
      %p168 = scmp.eq.s32.totalorder %s18, 0
      %p169 = por %p167, %p168
      %p170 = scmp.ne.s32.totalorder %s159, %s162
      %p171 = scmp.eq.s32.totalorder %s23, 1
      %p172 = por %p170, %p171
      %p173 = scmp.ne.s32.totalorder %s162, %s163
      %p174 = scmp.eq.s32.totalorder %s23, 0
      %p175 = por %p173, %p174
      %p176 = scmp.ne.s32.totalorder %s162, %s163
      %p177 = scmp.eq.s32.totalorder %s24, 1
      %p178 = por %p176, %p177
      %p180 = scmp.ne.s32.totalorder %s163, %s179
      %p181 = scmp.eq.s32.totalorder %s24, 0
      %p182 = por %p180, %p181
      %s183 = ssub.s32 %s18, %s25
      %p184 = scmp.eq.s32.totalorder %s183, 0
      %s186 = sadd.s32 %s185, 1
      %s187 = scalar_select %p184, %s185, %s186
      %p190 = pneg %p184
      %p191 = scmp.eq.s32.totalorder %s18, 1
      %p192 = por %p190, %p191
      %p193 = scmp.ne.s32.totalorder %s185, %s188
      %p194 = scmp.eq.s32.totalorder %s18, 0
      %p195 = por %p193, %p194
      %p196 = scmp.ne.s32.totalorder %s185, %s188
      %p197 = scmp.eq.s32.totalorder %s23, 1
      %p198 = por %p196, %p197
      %p199 = scmp.ne.s32.totalorder %s188, %s189
      %p200 = scmp.eq.s32.totalorder %s23, 0
      %p201 = por %p199, %p200
      %p202 = scmp.ne.s32.totalorder %s188, %s189
      %p203 = scmp.eq.s32.totalorder %s24, 1
      %p204 = por %p202, %p203
      %p206 = scmp.ne.s32.totalorder %s189, %s205
      %p207 = scmp.eq.s32.totalorder %s24, 0
      %p208 = por %p206, %p207
      %p209 = scmp.le.s32.totalorder 1, %s18
      %p210 = scmp.lt.s32.totalorder %s18, 3
      %p211 = pnand %p209, %p210
      %p212 = pneg %p211
      // Predicated region
      $region9: #{tpu_custom_call.1} parent=5 // pred_check
        _
      $region10: #{tpu_custom_call.1} parent=5 // pred_check_branch
        %214 = sbr.rel (%p211) target = $region12
      $region11: #{tpu_custom_call.1} parent=5 // pred_region
        %s215 = ssub.s32 %s18, 1
        // Predicated region
        $region13: #{tpu_custom_call.1} parent=11 // pred_check
          %p216 = pneg %p39
        $region14: #{tpu_custom_call.1} parent=11 // pred_check_branch
          %218 = sbr.rel (%p216) target = $region16
        $region15: #{tpu_custom_call.1} parent=11 // pred_region
          %s220 = ssub.s32 128, 128
          %221 = vsyncadd [#allocation3], %s220
          %s222 = sshll.u32 [#allocation2], 4
          %s223 = int_to_ptr.vmem [resolvable:$true] %s222
          %228 = dma.hbm_to_vmem [thread:$0]  %s0, 128, %s223, [#allocation3], 64, 64, 4
        $region16: #{tpu_custom_call.1} parent=11 // pred_fallthru
          _
        // Predicated region
        $region17: #{tpu_custom_call.1} parent=11 // pred_check
          %p229 = pneg %p60
        $region18: #{tpu_custom_call.1} parent=11 // pred_check_branch
          %231 = sbr.rel (%p229) target = $region20
        $region19: #{tpu_custom_call.1} parent=11 // pred_region
          %s233 = ssub.s32 1024, 1024
          %234 = vsyncadd [#allocation6], %s233
          %s235 = sshll.u32 [#allocation5], 4
          %s236 = int_to_ptr.vmem [resolvable:$true] %s235
          %241 = dma.hbm_to_vmem [thread:$0]  %s1, 1024, %s236, [#allocation6], 64, 64, 4
        $region20: #{tpu_custom_call.1} parent=11 // pred_fallthru
          _
        // Predicated region
        $region21: #{tpu_custom_call.1} parent=11 // pred_check
          %p242 = pneg %p81
        $region22: #{tpu_custom_call.1} parent=11 // pred_check_branch
          %244 = sbr.rel (%p242) target = $region24
        $region23: #{tpu_custom_call.1} parent=11 // pred_region
          _
        $region24: #{tpu_custom_call.1} parent=11 // pred_fallthru
          _
        // Predicated region
        $region25: #{tpu_custom_call.1} parent=11 // pred_check
          %p245 = pneg %p102
        $region26: #{tpu_custom_call.1} parent=11 // pred_check_branch
          %247 = sbr.rel (%p245) target = $region28
        $region27: #{tpu_custom_call.1} parent=11 // pred_region
          _
        $region28: #{tpu_custom_call.1} parent=11 // pred_fallthru
          _
        // Predicated region
        $region29: #{tpu_custom_call.1} parent=11 // pred_check
          %p248 = pneg %p123
        $region30: #{tpu_custom_call.1} parent=11 // pred_check_branch
          %250 = sbr.rel (%p248) target = $region32
        $region31: #{tpu_custom_call.1} parent=11 // pred_region
          _
        $region32: #{tpu_custom_call.1} parent=11 // pred_fallthru
          _
      $region12: #{tpu_custom_call.1} parent=5 // pred_fallthru
        _
      %p251 = scmp.lt.s32.totalorder %s18, 2
      // Predicated region
      $region33: #{tpu_custom_call.1} parent=5 // pred_check
        %p252 = pneg %p251
      $region34: #{tpu_custom_call.1} parent=5 // pred_check_branch
        %254 = sbr.rel (%p252) target = $region36
      $region35: #{tpu_custom_call.1} parent=5 // pred_region
        // Predicated region
        $region37: #{tpu_custom_call.1} parent=35 // pred_check
          %p255 = pneg %p143
        $region38: #{tpu_custom_call.1} parent=35 // pred_check_branch
          %257 = sbr.rel (%p255) target = $region40
        $region39: #{tpu_custom_call.1} parent=35 // pred_region
          %s258 = sand.u32 %s18, 1
          %s259 = scalar_lea.sflag [#allocation3], %s258
          %s260 = sand.u32 %s133, 1
          %s261 = smul.addr %s260, 128
          %s262 = scalar_lea.vmem [#allocation7], %s261
          %s263 = smul.u32 2, %s18
          %s265 = ssub.s32 2048, 2048
          %266 = vsyncadd %s259, %s265
          %s267 = smul.addr %s263, 64
          %s268 = scalar_lea.hbm %s5, %s267
          %s269 = sshll.u32 %s262, 4
          %s270 = int_to_ptr.vmem [resolvable:$true] %s269
          %275 = dma.hbm_to_vmem [thread:$0]  %s268, 2048, %s270, %s259, 256, 128, 8
        $region40: #{tpu_custom_call.1} parent=35 // pred_fallthru
          _
        // Predicated region
        $region41: #{tpu_custom_call.1} parent=35 // pred_check
          %p276 = pneg %p169
        $region42: #{tpu_custom_call.1} parent=35 // pred_check_branch
          %278 = sbr.rel (%p276) target = $region44
        $region43: #{tpu_custom_call.1} parent=35 // pred_region
          %s279 = smul.u32 2, %s18
          %p280 = scmp.lt.s32.totalorder %s279, 3
          %s281 = scalar_select %p280, %s279, 3
          %s282 = scalar_lea.vmem %s6, %s281
          %s283 = smul.u32 2, %s18
        $region44: #{tpu_custom_call.1} parent=35 // pred_fallthru
          _
      $region36: #{tpu_custom_call.1} parent=5 // pred_fallthru
        _
      %p284 = scmp.le.s32.totalorder 1, %s18
      %p285 = scmp.lt.s32.totalorder %s18, 3
      %p286 = pnand %p284, %p285
      %p287 = pneg %p286
      // Predicated region
      $region45: #{tpu_custom_call.1} parent=5 // pred_check
        _
      $region46: #{tpu_custom_call.1} parent=5 // pred_check_branch
        %289 = sbr.rel (%p286) target = $region48
      $region47: #{tpu_custom_call.1} parent=5 // pred_region
        %s290 = ssub.s32 %s18, 1
        // Predicated region
        $region49: #{tpu_custom_call.1} parent=47 // pred_check
          %p291 = pneg %p39
        $region50: #{tpu_custom_call.1} parent=47 // pred_check_branch
          %293 = sbr.rel (%p291) target = $region52
        $region51: #{tpu_custom_call.1} parent=47 // pred_region
          %294 = dma.done [#allocation3], 128
        $region52: #{tpu_custom_call.1} parent=47 // pred_fallthru
          _
        // Predicated region
        $region53: #{tpu_custom_call.1} parent=47 // pred_check
          %p295 = pneg %p60
        $region54: #{tpu_custom_call.1} parent=47 // pred_check_branch
          %297 = sbr.rel (%p295) target = $region56
        $region55: #{tpu_custom_call.1} parent=47 // pred_region
          %298 = dma.done [#allocation6], 1024
        $region56: #{tpu_custom_call.1} parent=47 // pred_fallthru
          _
        %s299 = sand.u32 %s23, 1
        %s300 = scalar_lea.sflag [#allocation3], %s299
        %s301 = sand.u32 %s136, 1
        %s302 = smul.addr %s301, 128
        %s303 = scalar_lea.vmem [#allocation7], %s302
        // Predicated region
        $region57: #{tpu_custom_call.1} parent=47 // pred_check
          %p304 = pneg %p149
        $region58: #{tpu_custom_call.1} parent=47 // pred_check_branch
          %306 = sbr.rel (%p304) target = $region60
        $region59: #{tpu_custom_call.1} parent=47 // pred_region
          %307 = dma.done %s300, 2048
        $region60: #{tpu_custom_call.1} parent=47 // pred_fallthru
          _
        %p308 = pneg %p39
        %p309 = pneg %p36
        %p310 = pneg %p60
        %p311 = pneg %p57
        %p312 = pneg %p81
        %p313 = pneg %p78
        %p314 = pneg %p102
        %p315 = pneg %p99
        %p316 = pneg %p123
        %p317 = pneg %p120
        %s318 = sand.u32 %s23, 1
        %s319 = scalar_lea.sflag [#allocation3], %s318
        %s320 = sand.u32 %s136, 1
        %s321 = smul.addr %s320, 128
        %s322 = scalar_lea.vmem [#allocation7], %s321
        %p323 = pneg %p149
        %p324 = pneg %p146
        %s325 = smul.u32 2, %s23
        %p326 = scmp.lt.s32.totalorder %s325, 3
        %s327 = scalar_select %p326, %s325, 3
        %s328 = scalar_lea.vmem %s6, %s327
        %p329 = pneg %p175
        %p330 = pneg %p172
        %p331 = pneg %p201
        %p332 = pneg %p198
        %s333 = sand.u32 %s188, 1
        %s334 = scalar_lea.sflag [#allocation4], %s333
        %s335 = sand.u32 %s188, 1
        %s336 = smul.addr %s335, 32
        %s337 = scalar_lea.vmem [#allocation8], %s336
        %s338 = smul.u32 2, %s23
        %s339 = smul.u32 2, %s23
        %p340 = scmp.lt.s32.totalorder %s339, 3
        %s341 = scalar_select %p340, %s339, 3
        %s342 = scalar_lea.vmem %s6, %s341
        %s343 = smul.u32 2, %s23
        %s344 = smul.u32 2, %s23
        %v346 = vld [vmem:[#allocation2] sm:$0xf]
        %v347 = vld [vmem:[#allocation2 + $0x4] sm:$0xf]
        %v348 = vld [vmem:[#allocation5] sm:$0xf]
        %v349 = vld [vmem:[#allocation5 + $0x4] sm:$0xf]
        %v350 = vld [vmem:[#allocation5 + $0x8] sm:$0xf]
        %v351 = vld [vmem:[#allocation5 + $0xc] sm:$0xf]
        %v352 = vld [vmem:[#allocation5 + $0x10] sm:$0xf]
        %v353 = vld [vmem:[#allocation5 + $0x14] sm:$0xf]
        %v354 = vld [vmem:[#allocation5 + $0x18] sm:$0xf]
        %v355 = vld [vmem:[#allocation5 + $0x1c] sm:$0xf]
        %v356 = vld [vmem:[#allocation5 + $0x20] sm:$0xf]
        %v357 = vld [vmem:[#allocation5 + $0x24] sm:$0xf]
        %v358 = vld [vmem:[#allocation5 + $0x28] sm:$0xf]
        %v359 = vld [vmem:[#allocation5 + $0x2c] sm:$0xf]
        %v360 = vld [vmem:[#allocation5 + $0x30] sm:$0xf]
        %v361 = vld [vmem:[#allocation5 + $0x34] sm:$0xf]
        %v362 = vld [vmem:[#allocation5 + $0x38] sm:$0xf]
        %v363 = vld [vmem:[#allocation5 + $0x3c] sm:$0xf]
        %v364 = vld [vmem:[%s2] sm:$0x1]
        %v366 = vlaneseq
        %v367 = vshrl.u32 %v366, 7
        %v368 = vsub.s32 0, %v367
        %v369 = vrot.slane %v364, %v368
        %v373 = vunpack.c.l.b16 %v346
        %v374 = vunpack.c.l.b16 %v347
        %v375 = vpack.c.b16 %v374, %v373
        %v393 = vunpack.c.l.b16 %v348
        %v394 = vunpack.c.l.b16 %v349
        %v395 = vunpack.c.l.b16 %v350
        %v396 = vunpack.c.l.b16 %v351
        %v397 = vunpack.c.l.b16 %v352
        %v398 = vunpack.c.l.b16 %v353
        %v399 = vunpack.c.l.b16 %v354
        %v400 = vunpack.c.l.b16 %v355
        %v401 = vunpack.c.l.b16 %v356
        %v402 = vunpack.c.l.b16 %v357
        %v403 = vunpack.c.l.b16 %v358
        %v404 = vunpack.c.l.b16 %v359
        %v405 = vunpack.c.l.b16 %v360
        %v406 = vunpack.c.l.b16 %v361
        %v407 = vunpack.c.l.b16 %v362
        %v408 = vunpack.c.l.b16 %v363
        %v409 = vpack.c.b16 %v394, %v393
        %v410 = vpack.c.b16 %v396, %v395
        %v411 = vpack.c.b16 %v398, %v397
        %v412 = vpack.c.b16 %v400, %v399
        %v413 = vpack.c.b16 %v402, %v401
        %v414 = vpack.c.b16 %v404, %v403
        %v415 = vpack.c.b16 %v406, %v405
        %v416 = vpack.c.b16 %v408, %v407
        %425 = vmatprep.subr.bf16.mxu0 0
        %426 = vmatpush1.bf16.msra.mxu0 %v416
        %427 = vmatprep.subr.bf16.mxu0 0
        %428 = vmatpush1.bf16.msra.mxu0 %v415
        %429 = vmatprep.subr.bf16.mxu0 0
        %430 = vmatpush1.bf16.msra.mxu0 %v414
        %431 = vmatprep.subr.bf16.mxu0 0
        %432 = vmatpush1.bf16.msra.mxu0 %v413
        %433 = vmatprep.subr.bf16.mxu0 0
        %434 = vmatpush1.bf16.msra.mxu0 %v412
        %435 = vmatprep.subr.bf16.mxu0 0
        %436 = vmatpush1.bf16.msra.mxu0 %v411
        %437 = vmatprep.subr.bf16.mxu0 0
        %438 = vmatpush1.bf16.msra.mxu0 %v410
        %439 = vmatprep.subr.bf16.mxu0 0
        %440 = vmatpush1.bf16.msra.mxu0 %v409
        %441 = vmatprep.subr.bf16.mxu0 0
        %442 = vmatpush2.bf16.msra.mxu0 0
        %443 = vmatprep.subr.bf16.mxu0 0
        %444 = vmatpush2.bf16.msra.mxu0 0
        %445 = vmatprep.subr.bf16.mxu0 0
        %446 = vmatpush2.bf16.msra.mxu0 0
        %447 = vmatprep.subr.bf16.mxu0 0
        %448 = vmatpush2.bf16.msra.mxu0 0
        %449 = vmatprep.subr.bf16.mxu0 0
        %450 = vmatpush2.bf16.msra.mxu0 0
        %451 = vmatprep.subr.bf16.mxu0 0
        %452 = vmatpush2.bf16.msra.mxu0 0
        %453 = vmatprep.subr.bf16.mxu0 0
        %454 = vmatpush2.bf16.msra.mxu0 0
        %455 = vmatprep.subr.bf16.mxu0 0
        %456 = vmatpush2.bf16.msra.mxu0 0
        %457 = vmatprep.mubr.bf16.mxu0 0
        %458 = vmatmul.mubr.bf16.gmra.mxu0 %v375
        %v459 = vpop.f32.mrf.mxu0
        %v460 = vadd.f32 %v369, %v459
        %v461 = vpop.f32.mrf.mxu0
        %v462 = vpop.f32.mrf.mxu0
        %v463 = vadd.f32 %v369, %v462
        %v464 = vpop.f32.mrf.mxu0
        %465 = vdwg.mxu0
        %v466 = vmax.f32 %v460, 0.0
        %v467 = vmax.f32 %v463, 0.0
        %468 = vadd.xlane.f32.xlu0 %v466
        %v469 = vpop.xlane.xlu0 %468
        %470 = vadd.xlane.f32.xlu0 %v467
        %v471 = vpop.xlane.xlu0 %470
        %v472 = vrcp.pop 128.0
        %v473 = vmul.f32 %v469, %v472
        %v474 = vmul.f32 %v471, %v472
        %v475 = vsub.f32 %v466, %v473
        %v476 = vsub.f32 %v467, %v474
        %v477 = vmul.f32 %v475, %v475
        %v478 = vmul.f32 %v476, %v476
        %479 = vadd.xlane.f32.xlu0 %v477
        %v480 = vpop.xlane.xlu0 %479
        %481 = vadd.xlane.f32.xlu0 %v478
        %v482 = vpop.xlane.xlu0 %481
        %v483 = vmul.f32 %v480, %v472
        %v484 = vmul.f32 %v482, %v472
        %v485 = vadd.f32 %v483, 1e-12
        %v486 = vadd.f32 %v484, 1e-12
        %v487 = vrsqrt.pop %v485
        %v488 = vrsqrt.pop %v486
        %v489 = vmul.f32 %v475, %v487
        %v490 = vmul.f32 %v476, %v488
        %v491 = vld [vmem:[%s3] sm:$0x1]
        %v493 = vlaneseq
        %v494 = vshrl.u32 %v493, 7
        %v495 = vsub.s32 0, %v494
        %v496 = vrot.slane %v491, %v495
        %v498 = vmul.f32 %v489, %v496
        %v499 = vmul.f32 %v490, %v496
        %v500 = vld [vmem:[%s4] sm:$0x1]
        %v502 = vlaneseq
        %v503 = vshrl.u32 %v502, 7
        %v504 = vsub.s32 0, %v503
        %v505 = vrot.slane %v500, %v504
        %v507 = vadd.f32 %v498, %v505
        %v508 = vadd.f32 %v499, %v505
        %v509 = vpack.c.bf16 %v508, %v507
        %v510 = vld [vmem:[%s303] sm:$0xff]
        %v511 = vld [vmem:[%s303 + $0x8] sm:$0xff]
        %v512 = vld [vmem:[%s303 + $0x10] sm:$0xff]
        %v513 = vld [vmem:[%s303 + $0x18] sm:$0xff]
        %v514 = vld [vmem:[%s303 + $0x20] sm:$0xff]
        %v515 = vld [vmem:[%s303 + $0x28] sm:$0xff]
        %v516 = vld [vmem:[%s303 + $0x30] sm:$0xff]
        %v517 = vld [vmem:[%s303 + $0x38] sm:$0xff]
        %v518 = vld [vmem:[%s303 + $0x40] sm:$0xff]
        %v519 = vld [vmem:[%s303 + $0x48] sm:$0xff]
        %v520 = vld [vmem:[%s303 + $0x50] sm:$0xff]
        %v521 = vld [vmem:[%s303 + $0x58] sm:$0xff]
        %v522 = vld [vmem:[%s303 + $0x60] sm:$0xff]
        %v523 = vld [vmem:[%s303 + $0x68] sm:$0xff]
        %v524 = vld [vmem:[%s303 + $0x70] sm:$0xff]
        %v525 = vld [vmem:[%s303 + $0x78] sm:$0xff]
        %v526 = vld [vmem:[%s342] sm:$0x3]
        %v528 = vlaneseq
        %v529 = vshrl.u32 %v528, 7
        %v530 = vsub.s32 0, %v529
        %v531 = vrot.slane %v526, %v530
        %v532 = vlaneseq
        %v533 = vshrl.u32 %v532, 7
        %v534 = vsub.s32 1, %v533
        %v535 = vrot.slane %v526, %v534
        %v554 = vunpack.c.l.b16 %v510
        %v555 = vunpack.c.h.b16 %v510
        %v556 = vunpack.c.l.b16 %v511
        %v557 = vunpack.c.h.b16 %v511
        %v558 = vunpack.c.l.b16 %v512
        %v559 = vunpack.c.h.b16 %v512
        %v560 = vunpack.c.l.b16 %v513
        %v561 = vunpack.c.h.b16 %v513
        %v562 = vunpack.c.l.b16 %v514
        %v563 = vunpack.c.h.b16 %v514
        %v564 = vunpack.c.l.b16 %v515
        %v565 = vunpack.c.h.b16 %v515
        %v566 = vunpack.c.l.b16 %v516
        %v567 = vunpack.c.h.b16 %v516
        %v568 = vunpack.c.l.b16 %v517
        %v569 = vunpack.c.h.b16 %v517
        %v570 = vunpack.c.l.b16 %v518
        %v571 = vunpack.c.h.b16 %v518
        %v572 = vunpack.c.l.b16 %v519
        %v573 = vunpack.c.h.b16 %v519
        %v574 = vunpack.c.l.b16 %v520
        %v575 = vunpack.c.h.b16 %v520
        %v576 = vunpack.c.l.b16 %v521
        %v577 = vunpack.c.h.b16 %v521
        %v578 = vunpack.c.l.b16 %v522
        %v579 = vunpack.c.h.b16 %v522
        %v580 = vunpack.c.l.b16 %v523
        %v581 = vunpack.c.h.b16 %v523
        %v582 = vunpack.c.l.b16 %v524
        %v583 = vunpack.c.h.b16 %v524
        %v584 = vunpack.c.l.b16 %v525
        %v585 = vunpack.c.h.b16 %v525
        %v586 = vpack.c.b16 %v556, %v554
        %v587 = vpack.c.b16 %v557, %v555
        %v588 = vpack.c.b16 %v560, %v558
        %v589 = vpack.c.b16 %v561, %v559
        %v590 = vpack.c.b16 %v564, %v562
        %v591 = vpack.c.b16 %v565, %v563
        %v592 = vpack.c.b16 %v568, %v566
        %v593 = vpack.c.b16 %v569, %v567
        %v594 = vpack.c.b16 %v572, %v570
        %v595 = vpack.c.b16 %v573, %v571
        %v596 = vpack.c.b16 %v576, %v574
        %v597 = vpack.c.b16 %v577, %v575
        %v598 = vpack.c.b16 %v580, %v578
        %v599 = vpack.c.b16 %v581, %v579
        %v600 = vpack.c.b16 %v584, %v582
        %v601 = vpack.c.b16 %v585, %v583
        %618 = vmatprep.subr.bf16.mxu0 %v601
        %619 = vmatpush1.bf16.msra.mxu0 %v600
        %620 = vmatprep.subr.bf16.mxu0 %v599
        %621 = vmatpush1.bf16.msra.mxu0 %v598
        %622 = vmatprep.subr.bf16.mxu0 %v597
        %623 = vmatpush1.bf16.msra.mxu0 %v596
        %624 = vmatprep.subr.bf16.mxu0 %v595
        %625 = vmatpush1.bf16.msra.mxu0 %v594
        %626 = vmatprep.subr.bf16.mxu0 %v593
        %627 = vmatpush1.bf16.msra.mxu0 %v592
        %628 = vmatprep.subr.bf16.mxu0 %v591
        %629 = vmatpush1.bf16.msra.mxu0 %v590
        %630 = vmatprep.subr.bf16.mxu0 %v589
        %631 = vmatpush1.bf16.msra.mxu0 %v588
        %632 = vmatprep.subr.bf16.mxu0 %v587
        %633 = vmatpush1.bf16.msra.mxu0 %v586
        %634 = vmatprep.subr.bf16.mxu0 0
        %635 = vmatpush2.bf16.msra.mxu0 0
        %636 = vmatprep.subr.bf16.mxu0 0
        %637 = vmatpush2.bf16.msra.mxu0 0
        %638 = vmatprep.subr.bf16.mxu0 0
        %639 = vmatpush2.bf16.msra.mxu0 0
        %640 = vmatprep.subr.bf16.mxu0 0
        %641 = vmatpush2.bf16.msra.mxu0 0
        %642 = vmatprep.subr.bf16.mxu0 0
        %643 = vmatpush2.bf16.msra.mxu0 0
        %644 = vmatprep.subr.bf16.mxu0 0
        %645 = vmatpush2.bf16.msra.mxu0 0
        %646 = vmatprep.subr.bf16.mxu0 0
        %647 = vmatpush2.bf16.msra.mxu0 0
        %648 = vmatprep.subr.bf16.mxu0 0
        %649 = vmatpush2.bf16.msra.mxu0 0
        %650 = vmatprep.mubr.bf16.mxu0 0
        %651 = vmatmul.mubr.bf16.gmra.mxu0 %v509
        %v652 = vpop.f32.mrf.mxu0
        %v653 = vadd.f32 %v531, %v652
        %v654 = vpop.f32.mrf.mxu0
        %v655 = vadd.f32 %v535, %v654
        %v656 = vpop.f32.mrf.mxu0
        %v657 = vadd.f32 %v531, %v656
        %v658 = vpop.f32.mrf.mxu0
        %v659 = vadd.f32 %v535, %v658
        %660 = vdwg.mxu0
        %661 = vst [vmem:[%s337] sm:$0xff] %v653
        %662 = vst [vmem:[%s337 + $0x8] sm:$0xff] %v655
        %663 = vst [vmem:[%s337 + $0x10] sm:$0xff] %v657
        %664 = vst [vmem:[%s337 + $0x18] sm:$0xff] %v659
        %s665 = sand.u32 %s188, 1
        %s666 = scalar_lea.sflag [#allocation4], %s665
        %s667 = sand.u32 %s188, 1
        %s668 = smul.addr %s667, 32
        %s669 = scalar_lea.vmem [#allocation8], %s668
        // Predicated region
        $region61: #{tpu_custom_call.1} parent=47 // pred_check
          %p670 = pneg %p198
        $region62: #{tpu_custom_call.1} parent=47 // pred_check_branch
          %672 = sbr.rel (%p670) target = $region64
        $region63: #{tpu_custom_call.1} parent=47 // pred_region
          %s673 = smul.u32 2, %s23
          %s675 = ssub.s32 512, 512
          %676 = vsyncadd %s666, %s675
          %s677 = smul.addr %s673, 128
          %s678 = scalar_lea.hbm %s7, %s677
          %s679 = sshll.u32 %s669, 4
          %s680 = int_to_ptr.vmem [resolvable:$true] %s679
          %685 = dma.vmem_to_hbm [thread:$0]  %s680, 512, %s678, %s666, 256, 512, 16
        $region64: #{tpu_custom_call.1} parent=47 // pred_fallthru
          _
      $region48: #{tpu_custom_call.1} parent=5 // pred_fallthru
        _
      %p686 = scmp.le.s32.totalorder 2, %s18
      // Predicated region
      $region65: #{tpu_custom_call.1} parent=5 // pred_check
        %p687 = pneg %p686
      $region66: #{tpu_custom_call.1} parent=5 // pred_check_branch
        %689 = sbr.rel (%p687) target = $region68
      $region67: #{tpu_custom_call.1} parent=5 // pred_region
        %s690 = ssub.s32 %s18, 2
        // Predicated region
        $region69: #{tpu_custom_call.1} parent=67 // pred_check
          %p691 = pneg %p204
        $region70: #{tpu_custom_call.1} parent=67 // pred_check_branch
          %693 = sbr.rel (%p691) target = $region72
        $region71: #{tpu_custom_call.1} parent=67 // pred_region
          %s694 = sand.u32 %s189, 1
          %s695 = scalar_lea.sflag [#allocation4], %s694
          %s696 = sand.u32 %s189, 1
          %s697 = smul.addr %s696, 32
          %s698 = scalar_lea.vmem [#allocation8], %s697
          %699 = dma.done %s695, 512
        $region72: #{tpu_custom_call.1} parent=67 // pred_fallthru
          _
      $region68: #{tpu_custom_call.1} parent=5 // pred_fallthru
        _
    $region6: #{tpu_custom_call.1} parent=1 // loop_footer
      %s22 = sadd.s32 1, %s18
    $region7: #{tpu_custom_call.1} parent=1 // loop_footer_branch
      %17 = sbr.rel target = $region3
    $region8: #{tpu_custom_call.1} parent=1 // loop_exit
      _
    %700 = vsyncpa [#allocation3], 1
    %s701 = scalar_lea.sflag [#allocation3], 1
    %702 = vsyncpa %s701, 1
    %703 = vsyncpa [#allocation6], 1
    %704 = vsyncpa [#allocation4], 1
    %s705 = scalar_lea.sflag [#allocation4], 1
    %706 = vsyncpa %s705, 1

// kernel: tpu_custom_call.1
$region0: #{tpu_custom_call.1}
  #allocation0 [shape = 'u32[]', space=smem, size = 0x4, offset = 0x4, fixed_abs, tag = 'smem constant byte address 0x4 - core index']
  #allocation1 [shape = 'u32[144,128]{1,0:T(1,128)}', space=vmem, size = 0x12000, scoped, tag = 'internal scratch']
  %s0 = inlined_call_operand.hbm [shape: bf16[16,128], index: 0, kind: input, shape index: {}]
  %s1 = inlined_call_operand.hbm [shape: bf16[128,128], index: 1, kind: input, shape index: {}]
  %s2 = inlined_call_operand.vmem [shape: f32[1,128], index: 2, kind: input, shape index: {}]
  %s3 = inlined_call_operand.vmem [shape: f32[1,128], index: 3, kind: input, shape index: {}]
  %s4 = inlined_call_operand.vmem [shape: f32[1,128], index: 4, kind: input, shape index: {}]
  %s5 = inlined_call_operand.hbm [shape: bf16[128,512], index: 5, kind: input, shape index: {}]
  %s6 = inlined_call_operand.vmem [shape: f32[1,512], index: 6, kind: input, shape index: {}]
  %s7 = inlined_call_operand.hbm [shape: f32[16,512], index: 7, kind: output, shape index: {}]
  %s8 = sld [smem:[#allocation0]]
  $region73: #{tpu_custom_call.1} parent=0
    _
  %s10 = ssub.s32 1, %s8
  %s11 = scalar_select 0, %s10, %s8
  $region1: #{tpu_custom_call.1} parent=0
    #allocation2 [shape = 'u8[4096]{0}', space=vmem, size = 0x1000, scoped, tag = 'input window, operand 0, single buffered']
    #allocation3 [shape = 's32[2]{0}', space=sflag, size = 0x8, scoped, tag = 'scoped memory for tpu_custom_call.1']
    #allocation4 [shape = 's32[2]{0}', space=sflag, size = 0x8, scoped, tag = 'scoped memory for tpu_custom_call.1']
    #allocation5 [shape = 'u8[32768]{0}', space=vmem, size = 0x8000, scoped, tag = 'input window, operand 1, single buffered']
    #allocation6 [shape = 's32[1]{0}', space=sflag, size = 0x4, scoped, tag = 'scoped memory for tpu_custom_call.1']
    #allocation7 [shape = 'u8[131072]{0}', space=vmem, size = 0x20000, scoped, tag = 'input window, operand 5']
    #allocation8 [shape = 'u8[32768]{0}', space=vmem, size = 0x8000, scoped, tag = 'output window, operand 0']
    %12 = vsyncpa [#allocation3], 0
    %13 = vsyncpa [#allocation6], 0
    %14 = vsyncpa [#allocation4], 0
    %s15 = scalar_lea.sflag [#allocation4], 1
    %16 = vsyncpa %s15, 0
    loop: start=0, step=1, limit=4
    $region2: #{tpu_custom_call.1} parent=1 // loop_pre_header
      _
    $region3: #{tpu_custom_call.1} parent=1 // loop_header
      %s18 = sphi 0, %s22
      %p19 = scmp.ge.s32.totalorder %s18, 4
      %s26 = sphi 0, %s26
      %s28 = sphi 0, %s26
      %s29 = sphi 0, %s28
      %s43 = sphi 0, %s29
      %s47 = sphi 0, %s47
      %s49 = sphi 0, %s47
      %s50 = sphi 0, %s49
      %s64 = sphi 0, %s50
      %s68 = sphi 0, %s68
      %s70 = sphi 0, %s68
      %s71 = sphi 0, %s70
      %s85 = sphi 0, %s71
      %s89 = sphi 0, %s89
      %s91 = sphi 0, %s89
      %s92 = sphi 0, %s91
      %s106 = sphi 0, %s92
      %s110 = sphi 0, %s110
      %s112 = sphi 0, %s110
      %s113 = sphi 0, %s112
      %s127 = sphi 0, %s113
      %s133 = sphi 0, %s135
      %s136 = sphi 0, %s133
      %s137 = sphi 0, %s136
      %s153 = sphi 0, %s137
      %s159 = sphi 0, %s161
      %s162 = sphi 0, %s159
      %s163 = sphi 0, %s162
      %s179 = sphi 0, %s163
      %s185 = sphi 0, %s187
      %s188 = sphi 0, %s185
      %s189 = sphi 0, %s188
      %s205 = sphi 0, %s189
    $region4: #{tpu_custom_call.1} parent=1 // loop_header_branch
      %21 = sbr.rel (%p19) target = $region8
    $region5: #{tpu_custom_call.1} parent=1 // loop_body
      %s23 = ssub.s32 %s18, 1
      %s24 = ssub.s32 %s18, 2
      %s25 = sadd.s32 %s18, 1
      %s27 = sadd.s32 %s26, 1
      %p30 = scmp.eq.s32.totalorder %s18, 1
      %p31 = scmp.ne.s32.totalorder %s26, %s28
      %p32 = scmp.eq.s32.totalorder %s18, 0
      %p33 = por %p31, %p32
      %p34 = scmp.ne.s32.totalorder %s26, %s28
      %p35 = scmp.eq.s32.totalorder %s23, 1
      %p36 = por %p34, %p35
      %p37 = scmp.ne.s32.totalorder %s28, %s29
      %p38 = scmp.eq.s32.totalorder %s23, 0
      %p39 = por %p37, %p38
      %p40 = scmp.ne.s32.totalorder %s28, %s29
      %p41 = scmp.eq.s32.totalorder %s24, 1
      %p42 = por %p40, %p41
      %p44 = scmp.ne.s32.totalorder %s29, %s43
      %p45 = scmp.eq.s32.totalorder %s24, 0
      %p46 = por %p44, %p45
      %s48 = sadd.s32 %s47, 1
      %p51 = scmp.eq.s32.totalorder %s18, 1
      %p52 = scmp.ne.s32.totalorder %s47, %s49
      %p53 = scmp.eq.s32.totalorder %s18, 0
      %p54 = por %p52, %p53
      %p55 = scmp.ne.s32.totalorder %s47, %s49
      %p56 = scmp.eq.s32.totalorder %s23, 1
      %p57 = por %p55, %p56
      %p58 = scmp.ne.s32.totalorder %s49, %s50
      %p59 = scmp.eq.s32.totalorder %s23, 0
      %p60 = por %p58, %p59
      %p61 = scmp.ne.s32.totalorder %s49, %s50
      %p62 = scmp.eq.s32.totalorder %s24, 1
      %p63 = por %p61, %p62
      %p65 = scmp.ne.s32.totalorder %s50, %s64
      %p66 = scmp.eq.s32.totalorder %s24, 0
      %p67 = por %p65, %p66
      %s69 = sadd.s32 %s68, 1
      %p72 = scmp.eq.s32.totalorder %s18, 1
      %p73 = scmp.ne.s32.totalorder %s68, %s70
      %p74 = scmp.eq.s32.totalorder %s18, 0
      %p75 = por %p73, %p74
      %p76 = scmp.ne.s32.totalorder %s68, %s70
      %p77 = scmp.eq.s32.totalorder %s23, 1
      %p78 = por %p76, %p77
      %p79 = scmp.ne.s32.totalorder %s70, %s71
      %p80 = scmp.eq.s32.totalorder %s23, 0
      %p81 = por %p79, %p80
      %p82 = scmp.ne.s32.totalorder %s70, %s71
      %p83 = scmp.eq.s32.totalorder %s24, 1
      %p84 = por %p82, %p83
      %p86 = scmp.ne.s32.totalorder %s71, %s85
      %p87 = scmp.eq.s32.totalorder %s24, 0
      %p88 = por %p86, %p87
      %s90 = sadd.s32 %s89, 1
      %p93 = scmp.eq.s32.totalorder %s18, 1
      %p94 = scmp.ne.s32.totalorder %s89, %s91
      %p95 = scmp.eq.s32.totalorder %s18, 0
      %p96 = por %p94, %p95
      %p97 = scmp.ne.s32.totalorder %s89, %s91
      %p98 = scmp.eq.s32.totalorder %s23, 1
      %p99 = por %p97, %p98
      %p100 = scmp.ne.s32.totalorder %s91, %s92
      %p101 = scmp.eq.s32.totalorder %s23, 0
      %p102 = por %p100, %p101
      %p103 = scmp.ne.s32.totalorder %s91, %s92
      %p104 = scmp.eq.s32.totalorder %s24, 1
      %p105 = por %p103, %p104
      %p107 = scmp.ne.s32.totalorder %s92, %s106
      %p108 = scmp.eq.s32.totalorder %s24, 0
      %p109 = por %p107, %p108
      %s111 = sadd.s32 %s110, 1
      %p114 = scmp.eq.s32.totalorder %s18, 1
      %p115 = scmp.ne.s32.totalorder %s110, %s112
      %p116 = scmp.eq.s32.totalorder %s18, 0
      %p117 = por %p115, %p116
      %p118 = scmp.ne.s32.totalorder %s110, %s112
      %p119 = scmp.eq.s32.totalorder %s23, 1
      %p120 = por %p118, %p119
      %p121 = scmp.ne.s32.totalorder %s112, %s113
      %p122 = scmp.eq.s32.totalorder %s23, 0
      %p123 = por %p121, %p122
      %p124 = scmp.ne.s32.totalorder %s112, %s113
      %p125 = scmp.eq.s32.totalorder %s24, 1
      %p126 = por %p124, %p125
      %p128 = scmp.ne.s32.totalorder %s113, %s127
      %p129 = scmp.eq.s32.totalorder %s24, 0
      %p130 = por %p128, %p129
      %s131 = ssub.s32 %s18, %s25
      %p132 = scmp.eq.s32.totalorder %s131, 0
      %s134 = sadd.s32 %s133, 1
      %s135 = scalar_select %p132, %s133, %s134
      %p138 = pneg %p132
      %p139 = scmp.eq.s32.totalorder %s18, 1
      %p140 = por %p138, %p139
      %p141 = scmp.ne.s32.totalorder %s133, %s136
      %p142 = scmp.eq.s32.totalorder %s18, 0
      %p143 = por %p141, %p142
      %p144 = scmp.ne.s32.totalorder %s133, %s136
      %p145 = scmp.eq.s32.totalorder %s23, 1
      %p146 = por %p144, %p145
      %p147 = scmp.ne.s32.totalorder %s136, %s137
      %p148 = scmp.eq.s32.totalorder %s23, 0
      %p149 = por %p147, %p148
      %p150 = scmp.ne.s32.totalorder %s136, %s137
      %p151 = scmp.eq.s32.totalorder %s24, 1
      %p152 = por %p150, %p151
      %p154 = scmp.ne.s32.totalorder %s137, %s153
      %p155 = scmp.eq.s32.totalorder %s24, 0
      %p156 = por %p154, %p155
      %s157 = ssub.s32 %s18, %s25
      %p158 = scmp.eq.s32.totalorder %s157, 0
      %s160 = sadd.s32 %s159, 1
      %s161 = scalar_select %p158, %s159, %s160
      %p164 = pneg %p158
      %p165 = scmp.eq.s32.totalorder %s18, 1
      %p166 = por %p164, %p165
      %p167 = scmp.ne.s32.totalorder %s159, %s162
      %p168 = scmp.eq.s32.totalorder %s18, 0
      %p169 = por %p167, %p168
      %p170 = scmp.ne.s32.totalorder %s159, %s162
      %p171 = scmp.eq.s32.totalorder %s23, 1
      %p172 = por %p170, %p171
      %p173 = scmp.ne.s32.totalorder %s162, %s163
      %p174 = scmp.eq.s32.totalorder %s23, 0
      %p175 = por %p173, %p174
      %p176 = scmp.ne.s32.totalorder %s162, %s163
      %p177 = scmp.eq.s32.totalorder %s24, 1
      %p178 = por %p176, %p177
      %p180 = scmp.ne.s32.totalorder %s163, %s179
      %p181 = scmp.eq.s32.totalorder %s24, 0
      %p182 = por %p180, %p181
      %s183 = ssub.s32 %s18, %s25
      %p184 = scmp.eq.s32.totalorder %s183, 0
      %s186 = sadd.s32 %s185, 1
      %s187 = scalar_select %p184, %s185, %s186
      %p190 = pneg %p184
      %p191 = scmp.eq.s32.totalorder %s18, 1
      %p192 = por %p190, %p191
      %p193 = scmp.ne.s32.totalorder %s185, %s188
      %p194 = scmp.eq.s32.totalorder %s18, 0
      %p195 = por %p193, %p194
      %p196 = scmp.ne.s32.totalorder %s185, %s188
      %p197 = scmp.eq.s32.totalorder %s23, 1
      %p198 = por %p196, %p197
      %p199 = scmp.ne.s32.totalorder %s188, %s189
      %p200 = scmp.eq.s32.totalorder %s23, 0
      %p201 = por %p199, %p200
      %p202 = scmp.ne.s32.totalorder %s188, %s189
      %p203 = scmp.eq.s32.totalorder %s24, 1
      %p204 = por %p202, %p203
      %p206 = scmp.ne.s32.totalorder %s189, %s205
      %p207 = scmp.eq.s32.totalorder %s24, 0
      %p208 = por %p206, %p207
      %p209 = scmp.le.s32.totalorder 1, %s18
      %p210 = scmp.lt.s32.totalorder %s18, 3
      %p211 = pnand %p209, %p210
      %p212 = pneg %p211
      // Predicated region
      $region9: #{tpu_custom_call.1} parent=5 // pred_check
        _
      $region10: #{tpu_custom_call.1} parent=5 // pred_check_branch
        %214 = sbr.rel (%p211) target = $region12
      $region11: #{tpu_custom_call.1} parent=5 // pred_region
        %s215 = ssub.s32 %s18, 1
        // Predicated region
        $region13: #{tpu_custom_call.1} parent=11 // pred_check
          %p216 = pneg %p39
        $region14: #{tpu_custom_call.1} parent=11 // pred_check_branch
          %218 = sbr.rel (%p216) target = $region16
        $region15: #{tpu_custom_call.1} parent=11 // pred_region
          %s220 = ssub.s32 128, 128
          %221 = vsyncadd [#allocation3], %s220
          %s222 = sshll.u32 [#allocation2], 4
          %s223 = int_to_ptr.vmem [resolvable:$true] %s222
          %228 = dma.hbm_to_vmem [thread:$0]  %s0, 128, %s223, [#allocation3], 64, 64, 4
        $region16: #{tpu_custom_call.1} parent=11 // pred_fallthru
          _
        // Predicated region
        $region17: #{tpu_custom_call.1} parent=11 // pred_check
          %p229 = pneg %p60
        $region18: #{tpu_custom_call.1} parent=11 // pred_check_branch
          %231 = sbr.rel (%p229) target = $region20
        $region19: #{tpu_custom_call.1} parent=11 // pred_region
          %s233 = ssub.s32 1024, 1024
          %234 = vsyncadd [#allocation6], %s233
          %s235 = sshll.u32 [#allocation5], 4
          %s236 = int_to_ptr.vmem [resolvable:$true] %s235
          %241 = dma.hbm_to_vmem [thread:$0]  %s1, 1024, %s236, [#allocation6], 64, 64, 4
        $region20: #{tpu_custom_call.1} parent=11 // pred_fallthru
          _
        // Predicated region
        $region21: #{tpu_custom_call.1} parent=11 // pred_check
          %p242 = pneg %p81
        $region22: #{tpu_custom_call.1} parent=11 // pred_check_branch
          %244 = sbr.rel (%p242) target = $region24
        $region23: #{tpu_custom_call.1} parent=11 // pred_region
          _
        $region24: #{tpu_custom_call.1} parent=11 // pred_fallthru
          _
        // Predicated region
        $region25: #{tpu_custom_call.1} parent=11 // pred_check
          %p245 = pneg %p102
        $region26: #{tpu_custom_call.1} parent=11 // pred_check_branch
          %247 = sbr.rel (%p245) target = $region28
        $region27: #{tpu_custom_call.1} parent=11 // pred_region
          _
        $region28: #{tpu_custom_call.1} parent=11 // pred_fallthru
          _
        // Predicated region
        $region29: #{tpu_custom_call.1} parent=11 // pred_check
          %p248 = pneg %p123
        $region30: #{tpu_custom_call.1} parent=11 // pred_check_branch
          %250 = sbr.rel (%p248) target = $region32
        $region31: #{tpu_custom_call.1} parent=11 // pred_region
          _
        $region32: #{tpu_custom_call.1} parent=11 // pred_fallthru
          _
      $region12: #{tpu_custom_call.1} parent=5 // pred_fallthru
        _
      %p251 = scmp.lt.s32.totalorder %s18, 2
      // Predicated region
      $region33: #{tpu_custom_call.1} parent=5 // pred_check
        %p252 = pneg %p251
      $region34: #{tpu_custom_call.1} parent=5 // pred_check_branch
        %254 = sbr.rel (%p252) target = $region36
      $region35: #{tpu_custom_call.1} parent=5 // pred_region
        // Predicated region
        $region37: #{tpu_custom_call.1} parent=35 // pred_check
          %p255 = pneg %p143
        $region38: #{tpu_custom_call.1} parent=35 // pred_check_branch
          %257 = sbr.rel (%p255) target = $region40
        $region39: #{tpu_custom_call.1} parent=35 // pred_region
          %s258 = sand.u32 %s18, 1
          %s259 = scalar_lea.sflag [#allocation3], %s258
          %s260 = sand.u32 %s133, 1
          %s261 = smul.addr %s260, 128
          %s262 = scalar_lea.vmem [#allocation7], %s261
          %s263 = smul.u32 2, %s18
          %s265 = ssub.s32 2048, 2048
          %266 = vsyncadd %s259, %s265
          %s267 = smul.addr %s263, 64
          %s268 = scalar_lea.hbm %s5, %s267
          %s269 = sshll.u32 %s262, 4
          %s270 = int_to_ptr.vmem [resolvable:$true] %s269
          %275 = dma.hbm_to_vmem [thread:$0]  %s268, 2048, %s270, %s259, 256, 128, 8
        $region40: #{tpu_custom_call.1} parent=35 // pred_fallthru
          _
        // Predicated region
        $region41: #{tpu_custom_call.1} parent=35 // pred_check
          %p276 = pneg %p169
        $region42: #{tpu_custom_call.1} parent=35 // pred_check_branch
          %278 = sbr.rel (%p276) target = $region44
        $region43: #{tpu_custom_call.1} parent=35 // pred_region
          %s279 = smul.u32 2, %s18
          %p280 = scmp.lt.s32.totalorder %s279, 3
          %s281 = scalar_select %p280, %s279, 3
          %s282 = scalar_lea.vmem %s6, %s281
          %s283 = smul.u32 2, %s18
        $region44: #{tpu_custom_call.1} parent=35 // pred_fallthru
          _
      $region36: #{tpu_custom_call.1} parent=5 // pred_fallthru
        _
      %p284 = scmp.le.s32.totalorder 1, %s18
      %p285 = scmp.lt.s32.totalorder %s18, 3
      %p286 = pnand %p284, %p285
      %p287 = pneg %p286
      // Predicated region
      $region45: #{tpu_custom_call.1} parent=5 // pred_check
        _
      $region46: #{tpu_custom_call.1} parent=5 // pred_check_branch
        %289 = sbr.rel (%p286) target = $region48
      $region47: #{tpu_custom_call.1} parent=5 // pred_region
        %s290 = ssub.s32 %s18, 1
        // Predicated region
        $region49: #{tpu_custom_call.1} parent=47 // pred_check
          %p291 = pneg %p39
        $region50: #{tpu_custom_call.1} parent=47 // pred_check_branch
          %293 = sbr.rel (%p291) target = $region52
        $region51: #{tpu_custom_call.1} parent=47 // pred_region
          %294 = dma.done [#allocation3], 128
        $region52: #{tpu_custom_call.1} parent=47 // pred_fallthru
          _
        // Predicated region
        $region53: #{tpu_custom_call.1} parent=47 // pred_check
          %p295 = pneg %p60
        $region54: #{tpu_custom_call.1} parent=47 // pred_check_branch
          %297 = sbr.rel (%p295) target = $region56
        $region55: #{tpu_custom_call.1} parent=47 // pred_region
          %298 = dma.done [#allocation6], 1024
        $region56: #{tpu_custom_call.1} parent=47 // pred_fallthru
          _
        %s299 = sand.u32 %s23, 1
        %s300 = scalar_lea.sflag [#allocation3], %s299
        %s301 = sand.u32 %s136, 1
        %s302 = smul.addr %s301, 128
        %s303 = scalar_lea.vmem [#allocation7], %s302
        // Predicated region
        $region57: #{tpu_custom_call.1} parent=47 // pred_check
          %p304 = pneg %p149
        $region58: #{tpu_custom_call.1} parent=47 // pred_check_branch
          %306 = sbr.rel (%p304) target = $region60
        $region59: #{tpu_custom_call.1} parent=47 // pred_region
          %307 = dma.done %s300, 2048
        $region60: #{tpu_custom_call.1} parent=47 // pred_fallthru
          _
        %p308 = pneg %p39
        %p309 = pneg %p36
        %p310 = pneg %p60
        %p311 = pneg %p57
        %p312 = pneg %p81
        %p313 = pneg %p78
        %p314 = pneg %p102
        %p315 = pneg %p99
        %p316 = pneg %p123
        %p317 = pneg %p120
        %s318 = sand.u32 %s23, 1
        %s319 = scalar_lea.sflag [#allocation3], %s318
        %s320 = sand.u32 %s136, 1
        %s321 = smul.addr %s320, 128
        %s322 = scalar_lea.vmem [#allocation7], %s321
        %p323 = pneg %p149
        %p324 = pneg %p146
        %s325 = smul.u32 2, %s23
        %p326 = scmp.lt.s32.totalorder %s325, 3
        %s327 = scalar_select %p326, %s325, 3
        %s328 = scalar_lea.vmem %s6, %s327
        %p329 = pneg %p175
        %p330 = pneg %p172
        %p331 = pneg %p201
        %p332 = pneg %p198
        %s333 = sand.u32 %s188, 1
        %s334 = scalar_lea.sflag [#allocation4], %s333
        %s335 = sand.u32 %s188, 1
        %s336 = smul.addr %s335, 32
        %s337 = scalar_lea.vmem [#allocation8], %s336
        %s338 = smul.u32 2, %s23
        %s339 = smul.u32 2, %s23
        %p340 = scmp.lt.s32.totalorder %s339, 3
        %s341 = scalar_select %p340, %s339, 3
        %s342 = scalar_lea.vmem %s6, %s341
        %s343 = smul.u32 2, %s23
        %s344 = smul.u32 2, %s23
        %v346 = vld [vmem:[#allocation2] sm:$0xf]
        %v347 = vld [vmem:[#allocation2 + $0x4] sm:$0xf]
        %v348 = vld [vmem:[#allocation5] sm:$0xf]
        %v349 = vld [vmem:[#allocation5 + $0x4] sm:$0xf]
        %v350 = vld [vmem:[#allocation5 + $0x8] sm:$0xf]
        %v351 = vld [vmem:[#allocation5 + $0xc] sm:$0xf]
        %v352 = vld [vmem:[#allocation5 + $0x10] sm:$0xf]
        %v353 = vld [vmem:[#allocation5 + $0x14] sm:$0xf]
        %v354 = vld [vmem:[#allocation5 + $0x18] sm:$0xf]
        %v355 = vld [vmem:[#allocation5 + $0x1c] sm:$0xf]
        %v356 = vld [vmem:[#allocation5 + $0x20] sm:$0xf]
        %v357 = vld [vmem:[#allocation5 + $0x24] sm:$0xf]
        %v358 = vld [vmem:[#allocation5 + $0x28] sm:$0xf]
        %v359 = vld [vmem:[#allocation5 + $0x2c] sm:$0xf]
        %v360 = vld [vmem:[#allocation5 + $0x30] sm:$0xf]
        %v361 = vld [vmem:[#allocation5 + $0x34] sm:$0xf]
        %v362 = vld [vmem:[#allocation5 + $0x38] sm:$0xf]
        %v363 = vld [vmem:[#allocation5 + $0x3c] sm:$0xf]
        %v364 = vld [vmem:[%s2] sm:$0x1]
        %v366 = vlaneseq
        %v367 = vshrl.u32 %v366, 7
        %v368 = vsub.s32 0, %v367
        %v369 = vrot.slane %v364, %v368
        %v373 = vunpack.c.l.b16 %v346
        %v374 = vunpack.c.l.b16 %v347
        %v375 = vpack.c.b16 %v374, %v373
        %v393 = vunpack.c.l.b16 %v348
        %v394 = vunpack.c.l.b16 %v349
        %v395 = vunpack.c.l.b16 %v350
        %v396 = vunpack.c.l.b16 %v351
        %v397 = vunpack.c.l.b16 %v352
        %v398 = vunpack.c.l.b16 %v353
        %v399 = vunpack.c.l.b16 %v354
        %v400 = vunpack.c.l.b16 %v355
        %v401 = vunpack.c.l.b16 %v356
        %v402 = vunpack.c.l.b16 %v357
        %v403 = vunpack.c.l.b16 %v358
        %v404 = vunpack.c.l.b16 %v359
        %v405 = vunpack.c.l.b16 %v360
        %v406 = vunpack.c.l.b16 %v361
        %v407 = vunpack.c.l.b16 %v362
        %v408 = vunpack.c.l.b16 %v363
        %v409 = vpack.c.b16 %v394, %v393
        %v410 = vpack.c.b16 %v396, %v395
        %v411 = vpack.c.b16 %v398, %v397
        %v412 = vpack.c.b16 %v400, %v399
        %v413 = vpack.c.b16 %v402, %v401
        %v414 = vpack.c.b16 %v404, %v403
        %v415 = vpack.c.b16 %v406, %v405
        %v416 = vpack.c.b16 %v408, %v407
        %425 = vmatprep.subr.bf16.mxu0 0
        %426 = vmatpush1.bf16.msra.mxu0 %v416
        %427 = vmatprep.subr.bf16.mxu0 0
        %428 = vmatpush1.bf16.msra.mxu0 %v415
        %429 = vmatprep.subr.bf16.mxu0 0
        %430 = vmatpush1.bf16.msra.mxu0 %v414
        %431 = vmatprep.subr.bf16.mxu0 0
        %432 = vmatpush1.bf16.msra.mxu0 %v413
        %433 = vmatprep.subr.bf16.mxu0 0
        %434 = vmatpush1.bf16.msra.mxu0 %v412
        %435 = vmatprep.subr.bf16.mxu0 0
        %436 = vmatpush1.bf16.msra.mxu0 %v411
        %437 = vmatprep.subr.bf16.mxu0 0
        %438 = vmatpush1.bf16.msra.mxu0 %v410
        %439 = vmatprep.subr.bf16.mxu0 0
        %440 = vmatpush1.bf16.msra.mxu0 %v409
        %441 = vmatprep.subr.bf16.mxu0 0
        %442 = vmatpush2.bf16.msra.mxu0 0
        %443 = vmatprep.subr.bf16.mxu0 0
        %444 = vmatpush2.bf16.msra.mxu0 0
        %445 = vmatprep.subr.bf16.mxu0 0
        %446 = vmatpush2.bf16.msra.mxu0 0
        %447 = vmatprep.subr.bf16.mxu0 0
        %448 = vmatpush2.bf16.msra.mxu0 0
        %449 = vmatprep.subr.bf16.mxu0 0
        %450 = vmatpush2.bf16.msra.mxu0 0
        %451 = vmatprep.subr.bf16.mxu0 0
        %452 = vmatpush2.bf16.msra.mxu0 0
        %453 = vmatprep.subr.bf16.mxu0 0
        %454 = vmatpush2.bf16.msra.mxu0 0
        %455 = vmatprep.subr.bf16.mxu0 0
        %456 = vmatpush2.bf16.msra.mxu0 0
        %457 = vmatprep.mubr.bf16.mxu0 0
        %458 = vmatmul.mubr.bf16.gmra.mxu0 %v375
        %v459 = vpop.f32.mrf.mxu0
        %v460 = vadd.f32 %v369, %v459
        %v461 = vpop.f32.mrf.mxu0
        %v462 = vpop.f32.mrf.mxu0
        %v463 = vadd.f32 %v369, %v462
        %v464 = vpop.f32.mrf.mxu0
        %465 = vdwg.mxu0
        %v466 = vmax.f32 %v460, 0.0
        %v467 = vmax.f32 %v463, 0.0
        %468 = vadd.xlane.f32.xlu0 %v466
        %v469 = vpop.xlane.xlu0 %468
        %470 = vadd.xlane.f32.xlu0 %v467
        %v471 = vpop.xlane.xlu0 %470
        %v472 = vrcp.pop 128.0
        %v473 = vmul.f32 %v469, %v472
        %v474 = vmul.f32 %v471, %v472
        %v475 = vsub.f32 %v466, %v473
        %v476 = vsub.f32 %v467, %v474
        %v477 = vmul.f32 %v475, %v475
        %v478 = vmul.f32 %v476, %v476
        %479 = vadd.xlane.f32.xlu0 %v477
        %v480 = vpop.xlane.xlu0 %479
        %481 = vadd.xlane.f32.xlu0 %v478
        %v482 = vpop.xlane.xlu0 %481
        %v483 = vmul.f32 %v480, %v472
        %v484 = vmul.f32 %v482, %v472
        %v485 = vadd.f32 %v483, 1e-12
        %v486 = vadd.f32 %v484, 1e-12
        %v487 = vrsqrt.pop %v485
        %v488 = vrsqrt.pop %v486
        %v489 = vmul.f32 %v475, %v487
        %v490 = vmul.f32 %v476, %v488
        %v491 = vld [vmem:[%s3] sm:$0x1]
        %v493 = vlaneseq
        %v494 = vshrl.u32 %v493, 7
        %v495 = vsub.s32 0, %v494
        %v496 = vrot.slane %v491, %v495
        %v498 = vmul.f32 %v489, %v496
        %v499 = vmul.f32 %v490, %v496
        %v500 = vld [vmem:[%s4] sm:$0x1]
        %v502 = vlaneseq
        %v503 = vshrl.u32 %v502, 7
        %v504 = vsub.s32 0, %v503
        %v505 = vrot.slane %v500, %v504
        %v507 = vadd.f32 %v498, %v505
        %v508 = vadd.f32 %v499, %v505
        %v509 = vpack.c.bf16 %v508, %v507
        %v510 = vld [vmem:[%s303] sm:$0xff]
        %v511 = vld [vmem:[%s303 + $0x8] sm:$0xff]
        %v512 = vld [vmem:[%s303 + $0x10] sm:$0xff]
        %v513 = vld [vmem:[%s303 + $0x18] sm:$0xff]
        %v514 = vld [vmem:[%s303 + $0x20] sm:$0xff]
        %v515 = vld [vmem:[%s303 + $0x28] sm:$0xff]
        %v516 = vld [vmem:[%s303 + $0x30] sm:$0xff]
        %v517 = vld [vmem:[%s303 + $0x38] sm:$0xff]
        %v518 = vld [vmem:[%s303 + $0x40] sm:$0xff]
        %v519 = vld [vmem:[%s303 + $0x48] sm:$0xff]
        %v520 = vld [vmem:[%s303 + $0x50] sm:$0xff]
        %v521 = vld [vmem:[%s303 + $0x58] sm:$0xff]
        %v522 = vld [vmem:[%s303 + $0x60] sm:$0xff]
        %v523 = vld [vmem:[%s303 + $0x68] sm:$0xff]
        %v524 = vld [vmem:[%s303 + $0x70] sm:$0xff]
        %v525 = vld [vmem:[%s303 + $0x78] sm:$0xff]
        %v526 = vld [vmem:[%s342] sm:$0x3]
        %v528 = vlaneseq
        %v529 = vshrl.u32 %v528, 7
        %v530 = vsub.s32 0, %v529
        %v531 = vrot.slane %v526, %v530
        %v532 = vlaneseq
        %v533 = vshrl.u32 %v532, 7
        %v534 = vsub.s32 1, %v533
        %v535 = vrot.slane %v526, %v534
        %v554 = vunpack.c.l.b16 %v510
        %v555 = vunpack.c.h.b16 %v510
        %v556 = vunpack.c.l.b16 %v511
        %v557 = vunpack.c.h.b16 %v511
        %v558 = vunpack.c.l.b16 %v512
        %v559 = vunpack.c.h.b16 %v512
        %v560 = vunpack.c.l.b16 %v513
        %v561 = vunpack.c.h.b16 %v513
        %v562 = vunpack.c.l.b16 %v514
        %v563 = vunpack.c.h.b16 %v514
        %v564 = vunpack.c.l.b16 %v515
        %v565 = vunpack.c.h.b16 %v515
        %v566 = vunpack.c.l.b16 %v516
        %v567 = vunpack.c.h.b16 %v516
        %v568 = vunpack.c.l.b16 %v517
        %v569 = vunpack.c.h.b16 %v517
        %v570 = vunpack.c.l.b16 %v518
        %v571 = vunpack.c.h.b16 %v518
        %v572 = vunpack.c.l.b16 %v519
        %v573 = vunpack.c.h.b16 %v519
        %v574 = vunpack.c.l.b16 %v520
        %v575 = vunpack.c.h.b16 %v520
        %v576 = vunpack.c.l.b16 %v521
        %v577 = vunpack.c.h.b16 %v521
        %v578 = vunpack.c.l.b16 %v522
        %v579 = vunpack.c.h.b16 %v522
        %v580 = vunpack.c.l.b16 %v523
        %v581 = vunpack.c.h.b16 %v523
        %v582 = vunpack.c.l.b16 %v524
        %v583 = vunpack.c.h.b16 %v524
        %v584 = vunpack.c.l.b16 %v525
        %v585 = vunpack.c.h.b16 %v525
        %v586 = vpack.c.b16 %v556, %v554
        %v587 = vpack.c.b16 %v557, %v555
        %v588 = vpack.c.b16 %v560, %v558
        %v589 = vpack.c.b16 %v561, %v559
        %v590 = vpack.c.b16 %v564, %v562
        %v591 = vpack.c.b16 %v565, %v563
        %v592 = vpack.c.b16 %v568, %v566
        %v593 = vpack.c.b16 %v569, %v567
        %v594 = vpack.c.b16 %v572, %v570
        %v595 = vpack.c.b16 %v573, %v571
        %v596 = vpack.c.b16 %v576, %v574
        %v597 = vpack.c.b16 %v577, %v575
        %v598 = vpack.c.b16 %v580, %v578
        %v599 = vpack.c.b16 %v581, %v579
        %v600 = vpack.c.b16 %v584, %v582
        %v601 = vpack.c.b16 %v585, %v583
        %618 = vmatprep.subr.bf16.mxu0 %v601
        %619 = vmatpush1.bf16.msra.mxu0 %v600
        %620 = vmatprep.subr.bf16.mxu0 %v599
        %621 = vmatpush1.bf16.msra.mxu0 %v598
        %622 = vmatprep.subr.bf16.mxu0 %v597
        %623 = vmatpush1.bf16.msra.mxu0 %v596
        %624 = vmatprep.subr.bf16.mxu0 %v595
        %625 = vmatpush1.bf16.msra.mxu0 %v594
        %626 = vmatprep.subr.bf16.mxu0 %v593
        %627 = vmatpush1.bf16.msra.mxu0 %v592
        %628 = vmatprep.subr.bf16.mxu0 %v591
        %629 = vmatpush1.bf16.msra.mxu0 %v590
        %630 = vmatprep.subr.bf16.mxu0 %v589
        %631 = vmatpush1.bf16.msra.mxu0 %v588
        %632 = vmatprep.subr.bf16.mxu0 %v587
        %633 = vmatpush1.bf16.msra.mxu0 %v586
        %634 = vmatprep.subr.bf16.mxu0 0
        %635 = vmatpush2.bf16.msra.mxu0 0
        %636 = vmatprep.subr.bf16.mxu0 0
        %637 = vmatpush2.bf16.msra.mxu0 0
        %638 = vmatprep.subr.bf16.mxu0 0
        %639 = vmatpush2.bf16.msra.mxu0 0
        %640 = vmatprep.subr.bf16.mxu0 0
        %641 = vmatpush2.bf16.msra.mxu0 0
        %642 = vmatprep.subr.bf16.mxu0 0
        %643 = vmatpush2.bf16.msra.mxu0 0
        %644 = vmatprep.subr.bf16.mxu0 0
        %645 = vmatpush2.bf16.msra.mxu0 0
        %646 = vmatprep.subr.bf16.mxu0 0
        %647 = vmatpush2.bf16.msra.mxu0 0
        %648 = vmatprep.subr.bf16.mxu0 0
        %649 = vmatpush2.bf16.msra.mxu0 0
        %650 = vmatprep.mubr.bf16.mxu0 0
        %651 = vmatmul.mubr.bf16.gmra.mxu0 %v509
        %v652 = vpop.f32.mrf.mxu0
        %v653 = vadd.f32 %v531, %v652
        %v654 = vpop.f32.mrf.mxu0
        %v655 = vadd.f32 %v535, %v654
        %v656 = vpop.f32.mrf.mxu0
        %v657 = vadd.f32 %v531, %v656
        %v658 = vpop.f32.mrf.mxu0
        %v659 = vadd.f32 %v535, %v658
        %660 = vdwg.mxu0
        %661 = vst [vmem:[%s337] sm:$0xff] %v653
        %662 = vst [vmem:[%s337 + $0x8] sm:$0xff] %v655
        %663 = vst [vmem:[%s337 + $0x10] sm:$0xff] %v657
        %664 = vst [vmem:[%s337 + $0x18] sm:$0xff] %v659
        %s665 = sand.u32 %s188, 1
        %s666 = scalar_lea.sflag [#allocation4], %s665
        %s667 = sand.u32 %s188, 1
        %s668 = smul.addr %s667, 32
        %s669 = scalar_lea.vmem [#allocation8], %s668
        // Predicated region
        $region61: #{tpu_custom_call.1} parent=47 // pred_check
          %p670 = pneg %p198
        $region62: #{tpu_custom_call.1} parent=47 // pred_check_branch
          %672 = sbr.rel (%p670) target = $region64
        $region63: #{tpu_custom_call.1} parent=47 // pred_region
          %s673 = smul.u32 2, %s23
          %s675 = ssub.s32 512, 512
          %676 = vsyncadd %s666, %s675
          %s677 = smul.addr %s673, 128
          %s678 = scalar_lea.hbm %s7, %s677
          %s679 = sshll.u32 %s669, 4
          %s680 = int_to_ptr.vmem [resolvable:$true] %s679
          %685 = dma.vmem_to_hbm [thread:$0]  %s680, 512, %s678, %s666, 256, 512, 16
        $region64: #{tpu_custom_call.1} parent=47 // pred_fallthru
          _
      $region48: #{tpu_custom_call.1} parent=5 // pred_fallthru
        _
      %p686 = scmp.le.s32.totalorder 2, %s18
      // Predicated region
      $region65: #{tpu_custom_call.1} parent=5 // pred_check
        %p687 = pneg %p686
      $region66: #{tpu_custom_call.1} parent=5 // pred_check_branch
        %689 = sbr.rel (%p687) target = $region68
      $region67: #{tpu_custom_call.1} parent=5 // pred_region
        %s690 = ssub.s32 %s18, 2
        // Predicated region
        $region69: #{tpu_custom_call.1} parent=67 // pred_check
          %p691 = pneg %p204
        $region70: #{tpu_custom_call.1} parent=67 // pred_check_branch
          %693 = sbr.rel (%p691) target = $region72
        $region71: #{tpu_custom_call.1} parent=67 // pred_region
          %s694 = sand.u32 %s189, 1
          %s695 = scalar_lea.sflag [#allocation4], %s694
          %s696 = sand.u32 %s189, 1
          %s697 = smul.addr %s696, 32
          %s698 = scalar_lea.vmem [#allocation8], %s697
          %699 = dma.done %s695, 512
        $region72: #{tpu_custom_call.1} parent=67 // pred_fallthru
          _
      $region68: #{tpu_custom_call.1} parent=5 // pred_fallthru
        _
    $region6: #{tpu_custom_call.1} parent=1 // loop_footer
      %s22 = sadd.s32 1, %s18
    $region7: #{tpu_custom_call.1} parent=1 // loop_footer_branch
      %17 = sbr.rel target = $region3
    $region8: #{tpu_custom_call.1} parent=1 // loop_exit
      _
    %700 = vsyncpa [#allocation3], 1
    %s701 = scalar_lea.sflag [#allocation3], 1
    %702 = vsyncpa %s701, 1
    %703 = vsyncpa [#allocation6], 1
    %704 = vsyncpa [#allocation4], 1
    %s705 = scalar_lea.sflag [#allocation4], 1
    %706 = vsyncpa %s705, 1

</llo_original>
